<compile_context>
chip_gen: v5e
topology: v5e:2x2
jax: 0.10.0
libtpu: 0.0.40
codegen_flags: <defaults>
</compile_context>

<pallas_src>
import functools

import jax
import jax.numpy as jnp
from jax import lax
from jax.experimental import pallas as pl
from jax.experimental.pallas import tpu as pltpu


def _ea_kernel(top_ref, mid_ref, bot_ref, w_ref, b_ref, o_ref, *, TH, W, C):
    """One (batch, row-block) tile per grid step.

    top_ref : (1, 1, W, C)   row above the block (clamped; zeroed at h == 0)
    mid_ref : (1, TH, W, C)  interior rows (auto-pipelined main stream)
    bot_ref : (1, 1, W, C)   row below the block (clamped; zeroed at h == nh-1)
    w_ref   : (9, C, C)      conv weight, tap t = 3*kh + kw, laid out (c_in, c_out)
    b_ref   : (1, C)         conv bias (f32)
    o_ref   : (1, TH, W, C)  output tile
    """
    h = pl.program_id(1)
    nh = pl.num_programs(1)
    f32 = jnp.float32
    M = TH * W

    x_mid = mid_ref[0].reshape(M, C)                                # (TH*W, C)
    zrow = jnp.zeros((1, W, C), x_mid.dtype)[0]                     # (W, C)
    top = jnp.where(h > 0, top_ref[0, 0], zrow)                     # conv zero pad
    bot = jnp.where(h < nh - 1, bot_ref[0, 0], zrow)

    # Row sets for the three kh taps (x[i-1], x[i], x[i+1]), flattened to
    # (TH*W, C).  Only row-plane copies; no lane-axis relayout, no 9C temp.
    if TH > 1:
        rows = (
            jnp.concatenate([top, x_mid[:M - W]], axis=0),          # kh = 0
            x_mid,                                                  # kh = 1
            jnp.concatenate([x_mid[W:], bot], axis=0),              # kh = 2
        )
    else:
        rows = (top, x_mid, bot)

    # 9 K=C matmuls accumulated in f32, grouped by kw so the width shift is
    # applied only twice (on the accumulators), not per tap.
    # TODO(synk): for tiny C (<= 16) a 9-tap VPU multiply-add path would beat
    # the MXU here; for C < 128 a lane-dense (W*C) output layout would avoid
    # masked partial stores.  Real realplksr runs dim = 64.
    acc_l = jnp.zeros((M, C), f32)      # kw = 0 tap (left neighbour)
    acc_c = jnp.zeros((M, C), f32)      # kw = 1 tap (centre)
    acc_r = jnp.zeros((M, C), f32)      # kw = 2 tap (right neighbour)
    for kh in range(3):
        lhs = rows[kh]
        acc_l = acc_l + jnp.dot(lhs, w_ref[3 * kh + 0], preferred_element_type=f32)
        acc_c = acc_c + jnp.dot(lhs, w_ref[3 * kh + 1], preferred_element_type=f32)
        acc_r = acc_r + jnp.dot(lhs, w_ref[3 * kh + 2], preferred_element_type=f32)

    # kw shifts: y[., j] += acc_l[., j-1] and y[., j] += acc_r[., j+1], with
    # zero at the image's left/right edge (conv zero padding).  The roll is an
    # XLU sublane rotate; the wrapped element is always masked out.
    col = lax.broadcasted_iota(jnp.int32, (M, 1), 0) % W
    y = acc_c + b_ref[...].astype(f32)
    y = y + jnp.where(col == 0, 0.0, pltpu.roll(acc_l, shift=1, axis=0))
    y = y + jnp.where(col == W - 1, 0.0, pltpu.roll(acc_r, shift=M - 1, axis=0))

    out = x_mid.astype(f32) * jax.nn.sigmoid(y)
    o_ref[0] = out.reshape(TH, W, C).astype(o_ref.dtype)


def _vmem_capacity_bytes():
    """Physical VMEM of the current generation (conservative fallback)."""
    try:
        cap = getattr(pltpu.get_tpu_info(), "vmem_capacity_bytes", None)
        if cap:
            return int(cap)
    except Exception:
        pass
    return 64 * 2 ** 20          # v7x-sized fallback (safe on every generation)


def _pick_block_rows(N, H, W, C, itemsize, budget_bytes):
    """Largest row-block whose per-block working set fits the VMEM budget.

    Per-row estimate: double-buffered in/out blocks + the three kh row sets in
    the activation dtype + ~8 f32-sized temporaries (3 accumulators, rolls, y,
    sigmoid, f32 out).  Prefers an exact divisor of H when one near the target
    exists (no padding); otherwise the caller pads H.  Keeps nh >= 2 for
    N == 1 so a 2-TC chip (v7x) shards the grid.
    """
    per_row = W * C * (7 * itemsize + 32)
    target = max(1, min(H, 512, budget_bytes // max(per_row, 1)))
    if N == 1 and H > 1:
        target = min(target, (H + 1) // 2)
    best = 1
    for d in range(1, target + 1):
        if H % d == 0:
            best = d
    return best if 2 * best >= target else target


def ea_forward_nhwc(x, weight, bias, *, block_rows=None):
    """EA forward in NHWC. x: (N, H, W, C); weight: (C, C, 3, 3) OIHW; bias: (C,)."""
    N, H, W, C = x.shape
    vmem_cap = _vmem_capacity_bytes()

    if block_rows is None:
        TH = _pick_block_rows(N, H, W, C, x.dtype.itemsize,
                              budget_bytes=int(vmem_cap * 0.45))
    else:
        TH = block_rows
    TH = max(1, min(TH, H))
    nh = pl.cdiv(H, TH)
    Hp = nh * TH
    if Hp > H:
        # Ragged height: zero rows reproduce the conv's zero padding; the
        # extra output rows are sliced off below.
        x = jnp.pad(x, ((0, 0), (0, Hp - H), (0, 0), (0, 0)))

    # (C_out, C_in, kh, kw) -> (3*kh + kw, c_in, c_out), cast to the activation
    # dtype so bf16 models stay on the fast MXU path (accumulation is f32).
    w9 = jnp.transpose(weight, (2, 3, 1, 0)).reshape(9, C, C).astype(x.dtype)
    b = bias.reshape(1, C).astype(jnp.float32)

    kernel = functools.partial(_ea_kernel, TH=TH, W=W, C=C)

    out = pl.pallas_call(
        kernel,
        out_shape=jax.ShapeDtypeStruct((N, Hp, W, C), x.dtype),
        grid_spec=pltpu.PrefetchScalarGridSpec(
            num_scalar_prefetch=0,
            grid=(N, nh),
            in_specs=[
                # 1-row halos, clamped at the image borders (zeroed in-kernel).
                pl.BlockSpec((1, 1, W, C),
                             lambda n, h: (n, jnp.maximum(h * TH - 1, 0), 0, 0)),
                # Interior rows: the auto-pipelined, double-buffered main stream.
                pl.BlockSpec((1, TH, W, C), lambda n, h: (n, h, 0, 0)),
                pl.BlockSpec((1, 1, W, C),
                             lambda n, h: (n, jnp.minimum(h * TH + TH, Hp - 1), 0, 0)),
                # Weight + bias: whole-array blocks, VMEM-resident.
                pl.BlockSpec((9, C, C), lambda n, h: (0, 0, 0)),
                pl.BlockSpec((1, C), lambda n, h: (0, 0)),
            ],
            out_specs=pl.BlockSpec((1, TH, W, C), lambda n, h: (n, h, 0, 0)),
        ),
        compiler_params=pltpu.CompilerParams(
            dimension_semantics=("parallel", "parallel"),
            vmem_limit_bytes=int(vmem_cap * 0.75),
        ),
    )(x, x, x, w9, b)   # same array feeds the halo and interior streams

    if Hp > H:
        out = out[:, :H]
    return out


def ea_forward(x_nchw, weight, bias, *, block_rows=None):
    """PyTorch-parity entry point (NCHW in / NCHW out)."""
    # TODO(synk): keep activations NHWC end-to-end in the full model and drop
    # these two transposes (each is an extra full HBM read+write pass).
    x = jnp.transpose(x_nchw, (0, 2, 3, 1))                 # NCHW -> NHWC
    y = ea_forward_nhwc(x, weight, bias, block_rows=block_rows)
    return jnp.transpose(y, (0, 3, 1, 2))                   # NHWC -> NCHW


def ea_reference(x_nchw, weight, bias):
    """Pure-JAX reference (NCHW conv), for correctness checking."""
    y = lax.conv_general_dilated(
        x_nchw.astype(jnp.float32), weight.astype(jnp.float32),
        window_strides=(1, 1), padding=((1, 1), (1, 1)),
        dimension_numbers=("NCHW", "OIHW", "NCHW"),
    ) + bias.reshape(1, -1, 1, 1).astype(jnp.float32)
    return x_nchw * jax.nn.sigmoid(y).astype(x_nchw.dtype)


def init_ea_params(key, dim, dtype=jnp.float32):
    """Deterministic init mirroring the module's __init__ shapes.

    weight: trunc_normal_(std=0.02)  -> (dim, dim, 3, 3)
    bias  : Conv2d default uniform(-1/sqrt(fan_in), 1/sqrt(fan_in)) -> (dim,)
    """
    kw, kb = jax.random.split(key)
    weight = 0.02 * jax.random.truncated_normal(
        kw, -2.0, 2.0, (dim, dim, 3, 3), dtype)
    fan_in = dim * 3 * 3
    bound = 1.0 / jnp.sqrt(jnp.asarray(fan_in, dtype))
    bias = jax.random.uniform(kb, (dim,), dtype, -bound, bound)
    return weight, bias


if __name__ == "__main__":
    key = jax.random.PRNGKey(0)
    k_x, k_p, k_x2 = jax.random.split(key, 3)

    N, C, H, W = 2, 4, 16, 16           # dim = 4
    x = jax.random.normal(k_x, (N, C, H, W), jnp.float32)
    weight, bias = init_ea_params(k_p, C)

    # (a) block_rows=4 -> grid (2, 4): exercises boundary (zeroed-halo) and
    #     interior (clamped-halo) row blocks.
    out = jax.block_until_ready(ea_forward(x, weight, bias, block_rows=4))
    ref = ea_reference(x, weight, bias)
    assert out.shape == (N, C, H, W)
    assert jnp.allclose(out, ref, atol=1e-5, rtol=1e-5), "mismatch vs reference (tiled)"

    # (b) ragged height with explicit block_rows -> padded-H path, grid (1, 3).
    x2 = jax.random.normal(k_x2, (1, C, 10, W), jnp.float32)
    out2 = jax.block_until_ready(ea_forward(x2, weight, bias, block_rows=4))
    ref2 = ea_reference(x2, weight, bias)
    assert out2.shape == x2.shape
    assert jnp.allclose(out2, ref2, atol=1e-5, rtol=1e-5), "mismatch vs reference (ragged H)"

    # (c) automatic block-size picker -> single row block per image, grid (2, 1).
    out3 = jax.block_until_ready(ea_forward(x, weight, bias))
    assert jnp.allclose(out3, ref, atol=1e-5, rtol=1e-5), "mismatch vs reference (auto TH)"

    print("KERNEL_OK")
</pallas_src>

<mosaic_0001>
module attributes {stable_mosaic.version = 11 : i64} {
  func.func @_ea_kernel(%arg0: i32, %arg1: i32, %arg2: memref<1x1x16x4xf32, #tpu.memory_space<vmem>>, %arg3: memref<1x4x16x4xf32, #tpu.memory_space<vmem>>, %arg4: memref<1x1x16x4xf32, #tpu.memory_space<vmem>>, %arg5: memref<9x4x4xf32, #tpu.memory_space<vmem>>, %arg6: memref<1x4xf32, #tpu.memory_space<vmem>>, %arg7: memref<1x4x16x4xf32, #tpu.memory_space<vmem>>) attributes {dimension_semantics = [#tpu.dimension_semantics<parallel>, #tpu.dimension_semantics<parallel>], iteration_bounds = array<i64: 2, 4>, scalar_prefetch = 0 : i64, scratch_operands = 0 : i64, tpu.core_type = #tpu.core_type<tc>, window_params = [{transform_indices = @transform_0, window_bounds = array<i64: 1, 1, 16, 4>}, {transform_indices = @transform_1, window_bounds = array<i64: 1, 4, 16, 4>}, {transform_indices = @transform_2, window_bounds = array<i64: 1, 1, 16, 4>}, {pipeline_mode = #tpu.pipeline_mode<synchronous>, transform_indices = @transform_3, window_bounds = array<i64: 9, 4, 4>}, {pipeline_mode = #tpu.pipeline_mode<synchronous>, transform_indices = @transform_4, window_bounds = array<i64: 1, 4>}, {transform_indices = @transform_5, window_bounds = array<i64: 1, 4, 16, 4>}]} {
    %c0 = arith.constant 0 : index
    %c0_0 = arith.constant 0 : index
    %c0_1 = arith.constant 0 : index
    %c0_2 = arith.constant 0 : index
    %0 = vector.load %arg3[%c0, %c0_0, %c0_1, %c0_2] : memref<1x4x16x4xf32, #tpu.memory_space<vmem>>, vector<1x4x16x4xf32>
    %1 = vector.shape_cast %0 : vector<1x4x16x4xf32> to vector<4x16x4xf32>
    %2 = vector.shape_cast %1 : vector<4x16x4xf32> to vector<64x4xf32>
    %cst = arith.constant 0.000000e+00 : f32
    %3 = vector.broadcast %cst : f32 to vector<1x16x4xf32>
    %4 = vector.shape_cast %3 : vector<1x16x4xf32> to vector<16x4xf32>
    %c0_i32 = arith.constant 0 : i32
    %5 = arith.cmpi sgt, %arg1, %c0_i32 : i32
    %c0_3 = arith.constant 0 : index
    %c0_4 = arith.constant 0 : index
    %c0_5 = arith.constant 0 : index
    %c0_6 = arith.constant 0 : index
    %6 = vector.load %arg2[%c0_3, %c0_4, %c0_5, %c0_6] : memref<1x1x16x4xf32, #tpu.memory_space<vmem>>, vector<1x1x16x4xf32>
    %7 = vector.shape_cast %6 : vector<1x1x16x4xf32> to vector<16x4xf32>
    %8 = arith.select %5, %7, %4 : vector<16x4xf32>
    %c3_i32 = arith.constant 3 : i32
    %9 = arith.cmpi slt, %arg1, %c3_i32 : i32
    %c0_7 = arith.constant 0 : index
    %c0_8 = arith.constant 0 : index
    %c0_9 = arith.constant 0 : index
    %c0_10 = arith.constant 0 : index
    %10 = vector.load %arg4[%c0_7, %c0_8, %c0_9, %c0_10] : memref<1x1x16x4xf32, #tpu.memory_space<vmem>>, vector<1x1x16x4xf32>
    %11 = vector.shape_cast %10 : vector<1x1x16x4xf32> to vector<16x4xf32>
    %12 = arith.select %9, %11, %4 : vector<16x4xf32>
    %13 = vector.extract_strided_slice %2 {offsets = [0, 0], sizes = [48, 4], strides = [1, 1]} : vector<64x4xf32> to vector<48x4xf32>
    %14 = tpu.concatenate %8, %13 in 0 : vector<16x4xf32>, vector<48x4xf32> -> vector<64x4xf32>
    %15 = vector.extract_strided_slice %2 {offsets = [16, 0], sizes = [48, 4], strides = [1, 1]} : vector<64x4xf32> to vector<48x4xf32>
    %16 = tpu.concatenate %15, %12 in 0 : vector<48x4xf32>, vector<16x4xf32> -> vector<64x4xf32>
    %cst_11 = arith.constant 0.000000e+00 : f32
    %17 = vector.broadcast %cst_11 : f32 to vector<64x4xf32>
    %cst_12 = arith.constant 0.000000e+00 : f32
    %18 = vector.broadcast %cst_12 : f32 to vector<64x4xf32>
    %cst_13 = arith.constant 0.000000e+00 : f32
    %19 = vector.broadcast %cst_13 : f32 to vector<64x4xf32>
    %c0_14 = arith.constant 0 : index
    %c0_15 = arith.constant 0 : index
    %c0_16 = arith.constant 0 : index
    %20 = vector.load %arg5[%c0_14, %c0_15, %c0_16] : memref<9x4x4xf32, #tpu.memory_space<vmem>>, vector<1x4x4xf32>
    %21 = vector.shape_cast %20 : vector<1x4x4xf32> to vector<4x4xf32>
    %cst_17 = arith.constant dense<0.000000e+00> : vector<64x4xf32>
    %22 = tpu.matmul %14, %21, %cst_17 {dimension_numbers = #tpu.dot_dimension_numbers<[1], [0], [0], [1], [0, 0, 1, 1], [], []>} : vector<64x4xf32>, vector<4x4xf32>, vector<64x4xf32> -> vector<64x4xf32>
    %23 = arith.addf %17, %22 : vector<64x4xf32>
    %c1 = arith.constant 1 : index
    %c0_18 = arith.constant 0 : index
    %c0_19 = arith.constant 0 : index
    %24 = vector.load %arg5[%c1, %c0_18, %c0_19] : memref<9x4x4xf32, #tpu.memory_space<vmem>>, vector<1x4x4xf32>
    %25 = vector.shape_cast %24 : vector<1x4x4xf32> to vector<4x4xf32>
    %cst_20 = arith.constant dense<0.000000e+00> : vector<64x4xf32>
    %26 = tpu.matmul %14, %25, %cst_20 {dimension_numbers = #tpu.dot_dimension_numbers<[1], [0], [0], [1], [0, 0, 1, 1], [], []>} : vector<64x4xf32>, vector<4x4xf32>, vector<64x4xf32> -> vector<64x4xf32>
    %27 = arith.addf %18, %26 : vector<64x4xf32>
    %c2 = arith.constant 2 : index
    %c0_21 = arith.constant 0 : index
    %c0_22 = arith.constant 0 : index
    %28 = vector.load %arg5[%c2, %c0_21, %c0_22] : memref<9x4x4xf32, #tpu.memory_space<vmem>>, vector<1x4x4xf32>
    %29 = vector.shape_cast %28 : vector<1x4x4xf32> to vector<4x4xf32>
    %cst_23 = arith.constant dense<0.000000e+00> : vector<64x4xf32>
    %30 = tpu.matmul %14, %29, %cst_23 {dimension_numbers = #tpu.dot_dimension_numbers<[1], [0], [0], [1], [0, 0, 1, 1], [], []>} : vector<64x4xf32>, vector<4x4xf32>, vector<64x4xf32> -> vector<64x4xf32>
    %31 = arith.addf %19, %30 : vector<64x4xf32>
    %c3 = arith.constant 3 : index
    %c0_24 = arith.constant 0 : index
    %c0_25 = arith.constant 0 : index
    %32 = vector.load %arg5[%c3, %c0_24, %c0_25] : memref<9x4x4xf32, #tpu.memory_space<vmem>>, vector<1x4x4xf32>
    %33 = vector.shape_cast %32 : vector<1x4x4xf32> to vector<4x4xf32>
    %cst_26 = arith.constant dense<0.000000e+00> : vector<64x4xf32>
    %34 = tpu.matmul %2, %33, %cst_26 {dimension_numbers = #tpu.dot_dimension_numbers<[1], [0], [0], [1], [0, 0, 1, 1], [], []>} : vector<64x4xf32>, vector<4x4xf32>, vector<64x4xf32> -> vector<64x4xf32>
    %35 = arith.addf %23, %34 : vector<64x4xf32>
    %c4 = arith.constant 4 : index
    %c0_27 = arith.constant 0 : index
    %c0_28 = arith.constant 0 : index
    %36 = vector.load %arg5[%c4, %c0_27, %c0_28] : memref<9x4x4xf32, #tpu.memory_space<vmem>>, vector<1x4x4xf32>
    %37 = vector.shape_cast %36 : vector<1x4x4xf32> to vector<4x4xf32>
    %cst_29 = arith.constant dense<0.000000e+00> : vector<64x4xf32>
    %38 = tpu.matmul %2, %37, %cst_29 {dimension_numbers = #tpu.dot_dimension_numbers<[1], [0], [0], [1], [0, 0, 1, 1], [], []>} : vector<64x4xf32>, vector<4x4xf32>, vector<64x4xf32> -> vector<64x4xf32>
    %39 = arith.addf %27, %38 : vector<64x4xf32>
    %c5 = arith.constant 5 : index
    %c0_30 = arith.constant 0 : index
    %c0_31 = arith.constant 0 : index
    %40 = vector.load %arg5[%c5, %c0_30, %c0_31] : memref<9x4x4xf32, #tpu.memory_space<vmem>>, vector<1x4x4xf32>
    %41 = vector.shape_cast %40 : vector<1x4x4xf32> to vector<4x4xf32>
    %cst_32 = arith.constant dense<0.000000e+00> : vector<64x4xf32>
    %42 = tpu.matmul %2, %41, %cst_32 {dimension_numbers = #tpu.dot_dimension_numbers<[1], [0], [0], [1], [0, 0, 1, 1], [], []>} : vector<64x4xf32>, vector<4x4xf32>, vector<64x4xf32> -> vector<64x4xf32>
    %43 = arith.addf %31, %42 : vector<64x4xf32>
    %c6 = arith.constant 6 : index
    %c0_33 = arith.constant 0 : index
    %c0_34 = arith.constant 0 : index
    %44 = vector.load %arg5[%c6, %c0_33, %c0_34] : memref<9x4x4xf32, #tpu.memory_space<vmem>>, vector<1x4x4xf32>
    %45 = vector.shape_cast %44 : vector<1x4x4xf32> to vector<4x4xf32>
    %cst_35 = arith.constant dense<0.000000e+00> : vector<64x4xf32>
    %46 = tpu.matmul %16, %45, %cst_35 {dimension_numbers = #tpu.dot_dimension_numbers<[1], [0], [0], [1], [0, 0, 1, 1], [], []>} : vector<64x4xf32>, vector<4x4xf32>, vector<64x4xf32> -> vector<64x4xf32>
    %47 = arith.addf %35, %46 : vector<64x4xf32>
    %c7 = arith.constant 7 : index
    %c0_36 = arith.constant 0 : index
    %c0_37 = arith.constant 0 : index
    %48 = vector.load %arg5[%c7, %c0_36, %c0_37] : memref<9x4x4xf32, #tpu.memory_space<vmem>>, vector<1x4x4xf32>
    %49 = vector.shape_cast %48 : vector<1x4x4xf32> to vector<4x4xf32>
    %cst_38 = arith.constant dense<0.000000e+00> : vector<64x4xf32>
    %50 = tpu.matmul %16, %49, %cst_38 {dimension_numbers = #tpu.dot_dimension_numbers<[1], [0], [0], [1], [0, 0, 1, 1], [], []>} : vector<64x4xf32>, vector<4x4xf32>, vector<64x4xf32> -> vector<64x4xf32>
    %51 = arith.addf %39, %50 : vector<64x4xf32>
    %c8 = arith.constant 8 : index
    %c0_39 = arith.constant 0 : index
    %c0_40 = arith.constant 0 : index
    %52 = vector.load %arg5[%c8, %c0_39, %c0_40] : memref<9x4x4xf32, #tpu.memory_space<vmem>>, vector<1x4x4xf32>
    %53 = vector.shape_cast %52 : vector<1x4x4xf32> to vector<4x4xf32>
    %cst_41 = arith.constant dense<0.000000e+00> : vector<64x4xf32>
    %54 = tpu.matmul %16, %53, %cst_41 {dimension_numbers = #tpu.dot_dimension_numbers<[1], [0], [0], [1], [0, 0, 1, 1], [], []>} : vector<64x4xf32>, vector<4x4xf32>, vector<64x4xf32> -> vector<64x4xf32>
    %55 = arith.addf %43, %54 : vector<64x4xf32>
    %56 = tpu.iota {dimensions = array<i32: 0>} : vector<64x1xi32>
    %c16_i32 = arith.constant 16 : i32
    %c0_i32_42 = arith.constant 0 : i32
    %57 = arith.cmpi eq, %c16_i32, %c0_i32_42 : i32
    %c1_i32 = arith.constant 1 : i32
    %58 = arith.select %57, %c1_i32, %c16_i32 : i32
    %59 = vector.broadcast %58 : i32 to vector<64x1xi32>
    %60 = arith.remsi %56, %59 : vector<64x1xi32>
    %c0_i32_43 = arith.constant 0 : i32
    %61 = vector.broadcast %c0_i32_43 : i32 to vector<64x1xi32>
    %62 = arith.cmpi ne, %60, %61 : vector<64x1xi32>
    %c0_i32_44 = arith.constant 0 : i32
    %63 = vector.broadcast %c0_i32_44 : i32 to vector<64x1xi32>
    %64 = arith.cmpi slt, %60, %63 : vector<64x1xi32>
    %c0_i32_45 = arith.constant 0 : i32
    %65 = arith.cmpi slt, %58, %c0_i32_45 : i32
    %66 = vector.broadcast %65 : i1 to vector<64x1xi1>
    %67 = vector.broadcast %66 : vector<64x1xi1> to vector<64x1xi1>
    %68 = arith.xori %64, %67 : vector<64x1xi1>
    %69 = arith.andi %68, %62 : vector<64x1xi1>
    %70 = vector.broadcast %58 : i32 to vector<64x1xi32>
    %71 = arith.addi %60, %70 : vector<64x1xi32>
    %72 = arith.select %69, %71, %60 : vector<64x1xi1>, vector<64x1xi32>
    %c0_46 = arith.constant 0 : index
    %c0_47 = arith.constant 0 : index
    %73 = vector.load %arg6[%c0_46, %c0_47] : memref<1x4xf32, #tpu.memory_space<vmem>>, vector<1x4xf32>
    %74 = vector.broadcast %73 : vector<1x4xf32> to vector<64x4xf32>
    %75 = arith.addf %51, %74 : vector<64x4xf32>
    %c0_i32_48 = arith.constant 0 : i32
    %76 = vector.broadcast %c0_i32_48 : i32 to vector<64x1xi32>
    %77 = arith.cmpi eq, %72, %76 : vector<64x1xi32>
    %c1_i32_49 = arith.constant 1 : i32
    %78 = tpu.dynamic_rotate %47 by %c1_i32_49 dim 0 : vector<64x4xf32>, i32 -> vector<64x4xf32>
    %cst_50 = arith.constant 0.000000e+00 : f32
    %79 = vector.shape_cast %77 : vector<64x1xi1> to vector<64x1xi1>
    %80 = vector.broadcast %79 : vector<64x1xi1> to vector<64x4xi1>
    %81 = vector.broadcast %cst_50 : f32 to vector<64x4xf32>
    %82 = arith.select %80, %81, %78 : vector<64x4xi1>, vector<64x4xf32>
    %83 = arith.addf %75, %82 : vector<64x4xf32>
    %c15_i32 = arith.constant 15 : i32
    %84 = vector.broadcast %c15_i32 : i32 to vector<64x1xi32>
    %85 = arith.cmpi eq, %72, %84 : vector<64x1xi32>
    %c63_i32 = arith.constant 63 : i32
    %86 = tpu.dynamic_rotate %55 by %c63_i32 dim 0 : vector<64x4xf32>, i32 -> vector<64x4xf32>
    %cst_51 = arith.constant 0.000000e+00 : f32
    %87 = vector.shape_cast %85 : vector<64x1xi1> to vector<64x1xi1>
    %88 = vector.broadcast %87 : vector<64x1xi1> to vector<64x4xi1>
    %89 = vector.broadcast %cst_51 : f32 to vector<64x4xf32>
    %90 = arith.select %88, %89, %86 : vector<64x4xi1>, vector<64x4xf32>
    %91 = arith.addf %83, %90 : vector<64x4xf32>
    %92 = arith.negf %91 : vector<64x4xf32>
    %93 = math.exp %92 : vector<64x4xf32>
    %cst_52 = arith.constant 1.000000e+00 : f32
    %94 = vector.broadcast %cst_52 : f32 to vector<64x4xf32>
    %95 = arith.addf %94, %93 : vector<64x4xf32>
    %96 = arith.divf %94, %95 : vector<64x4xf32>
    %97 = arith.mulf %2, %96 : vector<64x4xf32>
    %98 = vector.shape_cast %97 : vector<64x4xf32> to vector<4x16x4xf32>
    %c0_53 = arith.constant 0 : index
    %c0_54 = arith.constant 0 : index
    %c0_55 = arith.constant 0 : index
    %c0_56 = arith.constant 0 : index
    %99 = vector.load %arg7[%c0_53, %c0_54, %c0_55, %c0_56] : memref<1x4x16x4xf32, #tpu.memory_space<vmem>>, vector<1x4x16x4xf32>
    %100 = vector.shape_cast %99 : vector<1x4x16x4xf32> to vector<4x16x4xf32>
    %101 = vector.shape_cast %98 : vector<4x16x4xf32> to vector<1x4x16x4xf32>
    tpu.vector_store %arg7[%c0_53, %c0_54, %c0_55, %c0_56], %101 {strides = array<i32>} : memref<1x4x16x4xf32, #tpu.memory_space<vmem>>, vector<1x4x16x4xf32>,
    return
  }
  func.func @transform_0(%arg0: i32, %arg1: i32) -> (i32, i32, i32, i32) {
    %c4_i32 = arith.constant 4 : i32
    %0 = arith.muli %arg1, %c4_i32 : i32
    %c1_i32 = arith.constant 1 : i32
    %1 = arith.subi %0, %c1_i32 : i32
    %c0_i32 = arith.constant 0 : i32
    %2 = arith.maxsi %1, %c0_i32 : i32
    %c0_i32_0 = arith.constant 0 : i32
    %c0_i32_1 = arith.constant 0 : i32
    %c0_i32_2 = arith.constant 0 : i32
    return %arg0, %2, %c0_i32_0, %c0_i32_1 : i32, i32, i32, i32
  }
  func.func @transform_1(%arg0: i32, %arg1: i32) -> (i32, i32, i32, i32) {
    %c0_i32 = arith.constant 0 : i32
    %c0_i32_0 = arith.constant 0 : i32
    %c0_i32_1 = arith.constant 0 : i32
    return %arg0, %arg1, %c0_i32, %c0_i32_0 : i32, i32, i32, i32
  }
  func.func @transform_2(%arg0: i32, %arg1: i32) -> (i32, i32, i32, i32) {
    %c4_i32 = arith.constant 4 : i32
    %0 = arith.muli %arg1, %c4_i32 : i32
    %c4_i32_0 = arith.constant 4 : i32
    %1 = arith.addi %0, %c4_i32_0 : i32
    %c15_i32 = arith.constant 15 : i32
    %2 = arith.minsi %1, %c15_i32 : i32
    %c0_i32 = arith.constant 0 : i32
    %c0_i32_1 = arith.constant 0 : i32
    %c0_i32_2 = arith.constant 0 : i32
    return %arg0, %2, %c0_i32, %c0_i32_1 : i32, i32, i32, i32
  }
  func.func @transform_3(%arg0: i32, %arg1: i32) -> (i32, i32, i32) {
    %c0_i32 = arith.constant 0 : i32
    %c0_i32_0 = arith.constant 0 : i32
    %c0_i32_1 = arith.constant 0 : i32
    %c0_i32_2 = arith.constant 0 : i32
    return %c0_i32, %c0_i32_0, %c0_i32_1 : i32, i32, i32
  }
  func.func @transform_4(%arg0: i32, %arg1: i32) -> (i32, i32) {
    %c0_i32 = arith.constant 0 : i32
    %c0_i32_0 = arith.constant 0 : i32
    %c0_i32_1 = arith.constant 0 : i32
    return %c0_i32, %c0_i32_0 : i32, i32
  }
  func.func @transform_5(%arg0: i32, %arg1: i32) -> (i32, i32, i32, i32) {
    %c0_i32 = arith.constant 0 : i32
    %c0_i32_0 = arith.constant 0 : i32
    %c0_i32_1 = arith.constant 0 : i32
    return %arg0, %arg1, %c0_i32, %c0_i32_0 : i32, i32, i32, i32
  }
}

</mosaic_0001>

<llo_original>
// kernel: tpu_custom_call.1
$region0: #{tpu_custom_call.1}
  #allocation0 [shape = 'u32[]', space=smem, size = 0x4, offset = 0x4, fixed_abs, tag = 'smem constant byte address 0x4 - core index']
  #allocation1 [shape = 'u32[72,128]{1,0:T(1,128)}', space=vmem, size = 0x9000, scoped, tag = 'internal scratch']
  %s0 = inlined_call_operand.vmem [shape: f32[2,16,16,4], index: 0, kind: input, shape index: {}]
  %s1 = inlined_call_operand.vmem [shape: f32[2,16,16,4], index: 1, kind: input, shape index: {}]
  %s2 = inlined_call_operand.vmem [shape: f32[2,16,16,4], index: 2, kind: input, shape index: {}]
  %s3 = inlined_call_operand.vmem [shape: f32[9,4,4], index: 3, kind: input, shape index: {}]
  %s4 = inlined_call_operand.vmem [shape: f32[1,4], index: 4, kind: input, shape index: {}]
  %s5 = inlined_call_operand.vmem [shape: f32[2,16,16,4], index: 5, kind: output, shape index: {}]
  %s6 = sld [smem:[#allocation0]]
  $region53: #{tpu_custom_call.1} parent=0
    _
  %s8 = ssub.s32 1, %s6
  %s9 = scalar_select 0, %s8, %s6
  loop: start=0, step=1, limit=10
  $region2: #{tpu_custom_call.1} parent=0 // loop_pre_header
    _
  $region3: #{tpu_custom_call.1} parent=0 // loop_header
    %s11 = sphi 0, %s15
    %p12 = scmp.ge.s32.totalorder %s11, 10
    %s18 = sphi 0, %s30
    %s19 = sphi 0, %s26
    %s20 = sphi 0, %s18
    %s21 = sphi 0, %s19
    %s22 = sphi 0, %s20
    %s23 = sphi 0, %s21
    %s43 = sphi 0, %s45
    %s46 = sphi 0, %s43
    %s47 = sphi 0, %s46
    %s63 = sphi 0, %s47
    %s71 = sphi 0, %s73
    %s74 = sphi 0, %s71
    %s75 = sphi 0, %s74
    %s91 = sphi 0, %s75
    %s107 = sphi 0, %s109
    %s110 = sphi 0, %s107
    %s111 = sphi 0, %s110
    %s127 = sphi 0, %s111
    %s131 = sphi 0, %s131
    %s133 = sphi 0, %s131
    %s134 = sphi 0, %s133
    %s148 = sphi 0, %s134
    %s152 = sphi 0, %s152
    %s154 = sphi 0, %s152
    %s155 = sphi 0, %s154
    %s169 = sphi 0, %s155
    %s177 = sphi 0, %s179
    %s180 = sphi 0, %s177
    %s181 = sphi 0, %s180
    %s197 = sphi 0, %s181
  $region4: #{tpu_custom_call.1} parent=0 // loop_header_branch
    %14 = sbr.rel (%p12) target = $region8
  $region5: #{tpu_custom_call.1} parent=0 // loop_body
    %s16 = ssub.s32 %s11, 1
    %s17 = ssub.s32 %s11, 2
    %s24 = sadd.s32 1, %s19
    %p25 = scmp.ge.s32.totalorder %s24, 4
    %s26 = scalar_select %p25, 0, %s24
    %s27 = sadd.s32 1, %s18
    %s28 = scalar_select %p25, %s27, %s18
    %p29 = scmp.ge.s32.totalorder %s28, 2
    %s30 = scalar_select %p29, 0, %s28
    %s31 = smul.u32 %s19, 4
    %s32 = ssub.s32 %s31, 1
    %p33 = scmp.gt.s32.totalorder %s32, 0
    %s34 = scalar_select %p33, %s32, 0
    %s35 = smul.u32 %s26, 4
    %s36 = ssub.s32 %s35, 1
    %p37 = scmp.gt.s32.totalorder %s36, 0
    %s38 = scalar_select %p37, %s36, 0
    %s39 = ssub.s32 %s18, %s30
    %s40 = ssub.s32 %s34, %s38
    %s41 = sor.u32 %s39, %s40
    %p42 = scmp.eq.s32.totalorder %s41, 0
    %s44 = sadd.s32 %s43, 1
    %s45 = scalar_select %p42, %s43, %s44
    %p48 = pneg %p42
    %p49 = scmp.eq.s32.totalorder %s11, 7
    %p50 = por %p48, %p49
    %p51 = scmp.ne.s32.totalorder %s43, %s46
    %p52 = scmp.eq.s32.totalorder %s11, 0
    %p53 = por %p51, %p52
    %p54 = scmp.ne.s32.totalorder %s43, %s46
    %p55 = scmp.eq.s32.totalorder %s16, 7
    %p56 = por %p54, %p55
    %p57 = scmp.ne.s32.totalorder %s46, %s47
    %p58 = scmp.eq.s32.totalorder %s16, 0
    %p59 = por %p57, %p58
    %p60 = scmp.ne.s32.totalorder %s46, %s47
    %p61 = scmp.eq.s32.totalorder %s17, 7
    %p62 = por %p60, %p61
    %p64 = scmp.ne.s32.totalorder %s47, %s63
    %p65 = scmp.eq.s32.totalorder %s17, 0
    %p66 = por %p64, %p65
    %s67 = ssub.s32 %s18, %s30
    %s68 = ssub.s32 %s19, %s26
    %s69 = sor.u32 %s67, %s68
    %p70 = scmp.eq.s32.totalorder %s69, 0
    %s72 = sadd.s32 %s71, 1
    %s73 = scalar_select %p70, %s71, %s72
    %p76 = pneg %p70
    %p77 = scmp.eq.s32.totalorder %s11, 7
    %p78 = por %p76, %p77
    %p79 = scmp.ne.s32.totalorder %s71, %s74
    %p80 = scmp.eq.s32.totalorder %s11, 0
    %p81 = por %p79, %p80
    %p82 = scmp.ne.s32.totalorder %s71, %s74
    %p83 = scmp.eq.s32.totalorder %s16, 7
    %p84 = por %p82, %p83
    %p85 = scmp.ne.s32.totalorder %s74, %s75
    %p86 = scmp.eq.s32.totalorder %s16, 0
    %p87 = por %p85, %p86
    %p88 = scmp.ne.s32.totalorder %s74, %s75
    %p89 = scmp.eq.s32.totalorder %s17, 7
    %p90 = por %p88, %p89
    %p92 = scmp.ne.s32.totalorder %s75, %s91
    %p93 = scmp.eq.s32.totalorder %s17, 0
    %p94 = por %p92, %p93
    %s95 = smul.u32 %s19, 4
    %s96 = sadd.s32 %s95, 4
    %p97 = scmp.lt.s32.totalorder %s96, 15
    %s98 = scalar_select %p97, %s96, 15
    %s99 = smul.u32 %s26, 4
    %s100 = sadd.s32 %s99, 4
    %p101 = scmp.lt.s32.totalorder %s100, 15
    %s102 = scalar_select %p101, %s100, 15
    %s103 = ssub.s32 %s18, %s30
    %s104 = ssub.s32 %s98, %s102
    %s105 = sor.u32 %s103, %s104
    %p106 = scmp.eq.s32.totalorder %s105, 0
    %s108 = sadd.s32 %s107, 1
    %s109 = scalar_select %p106, %s107, %s108
    %p112 = pneg %p106
    %p113 = scmp.eq.s32.totalorder %s11, 7
    %p114 = por %p112, %p113
    %p115 = scmp.ne.s32.totalorder %s107, %s110
    %p116 = scmp.eq.s32.totalorder %s11, 0
    %p117 = por %p115, %p116
    %p118 = scmp.ne.s32.totalorder %s107, %s110
    %p119 = scmp.eq.s32.totalorder %s16, 7
    %p120 = por %p118, %p119
    %p121 = scmp.ne.s32.totalorder %s110, %s111
    %p122 = scmp.eq.s32.totalorder %s16, 0
    %p123 = por %p121, %p122
    %p124 = scmp.ne.s32.totalorder %s110, %s111
    %p125 = scmp.eq.s32.totalorder %s17, 7
    %p126 = por %p124, %p125
    %p128 = scmp.ne.s32.totalorder %s111, %s127
    %p129 = scmp.eq.s32.totalorder %s17, 0
    %p130 = por %p128, %p129
    %s132 = sadd.s32 %s131, 1
    %p135 = scmp.eq.s32.totalorder %s11, 7
    %p136 = scmp.ne.s32.totalorder %s131, %s133
    %p137 = scmp.eq.s32.totalorder %s11, 0
    %p138 = por %p136, %p137
    %p139 = scmp.ne.s32.totalorder %s131, %s133
    %p140 = scmp.eq.s32.totalorder %s16, 7
    %p141 = por %p139, %p140
    %p142 = scmp.ne.s32.totalorder %s133, %s134
    %p143 = scmp.eq.s32.totalorder %s16, 0
    %p144 = por %p142, %p143
    %p145 = scmp.ne.s32.totalorder %s133, %s134
    %p146 = scmp.eq.s32.totalorder %s17, 7
    %p147 = por %p145, %p146
    %p149 = scmp.ne.s32.totalorder %s134, %s148
    %p150 = scmp.eq.s32.totalorder %s17, 0
    %p151 = por %p149, %p150
    %s153 = sadd.s32 %s152, 1
    %p156 = scmp.eq.s32.totalorder %s11, 7
    %p157 = scmp.ne.s32.totalorder %s152, %s154
    %p158 = scmp.eq.s32.totalorder %s11, 0
    %p159 = por %p157, %p158
    %p160 = scmp.ne.s32.totalorder %s152, %s154
    %p161 = scmp.eq.s32.totalorder %s16, 7
    %p162 = por %p160, %p161
    %p163 = scmp.ne.s32.totalorder %s154, %s155
    %p164 = scmp.eq.s32.totalorder %s16, 0
    %p165 = por %p163, %p164
    %p166 = scmp.ne.s32.totalorder %s154, %s155
    %p167 = scmp.eq.s32.totalorder %s17, 7
    %p168 = por %p166, %p167
    %p170 = scmp.ne.s32.totalorder %s155, %s169
    %p171 = scmp.eq.s32.totalorder %s17, 0
    %p172 = por %p170, %p171
    %s173 = ssub.s32 %s18, %s30
    %s174 = ssub.s32 %s19, %s26
    %s175 = sor.u32 %s173, %s174
    %p176 = scmp.eq.s32.totalorder %s175, 0
    %s178 = sadd.s32 %s177, 1
    %s179 = scalar_select %p176, %s177, %s178
    %p182 = pneg %p176
    %p183 = scmp.eq.s32.totalorder %s11, 7
    %p184 = por %p182, %p183
    %p185 = scmp.ne.s32.totalorder %s177, %s180
    %p186 = scmp.eq.s32.totalorder %s11, 0
    %p187 = por %p185, %p186
    %p188 = scmp.ne.s32.totalorder %s177, %s180
    %p189 = scmp.eq.s32.totalorder %s16, 7
    %p190 = por %p188, %p189
    %p191 = scmp.ne.s32.totalorder %s180, %s181
    %p192 = scmp.eq.s32.totalorder %s16, 0
    %p193 = por %p191, %p192
    %p194 = scmp.ne.s32.totalorder %s180, %s181
    %p195 = scmp.eq.s32.totalorder %s17, 7
    %p196 = por %p194, %p195
    %p198 = scmp.ne.s32.totalorder %s181, %s197
    %p199 = scmp.eq.s32.totalorder %s17, 0
    %p200 = por %p198, %p199
    %p201 = scmp.le.s32.totalorder 1, %s11
    %p202 = scmp.lt.s32.totalorder %s11, 9
    %p203 = pnand %p201, %p202
    %p204 = pneg %p203
    // Predicated region
    $region9: #{tpu_custom_call.1} parent=5 // pred_check
      _
    $region10: #{tpu_custom_call.1} parent=5 // pred_check_branch
      %206 = sbr.rel (%p203) target = $region12
    $region11: #{tpu_custom_call.1} parent=5 // pred_region
      %s207 = ssub.s32 %s11, 1
      // Predicated region
      $region13: #{tpu_custom_call.1} parent=11 // pred_check
        %p208 = pneg %p144
      $region14: #{tpu_custom_call.1} parent=11 // pred_check_branch
        %210 = sbr.rel (%p208) target = $region16
      $region15: #{tpu_custom_call.1} parent=11 // pred_region
        _
      $region16: #{tpu_custom_call.1} parent=11 // pred_fallthru
        _
      // Predicated region
      $region17: #{tpu_custom_call.1} parent=11 // pred_check
        %p211 = pneg %p165
      $region18: #{tpu_custom_call.1} parent=11 // pred_check_branch
        %213 = sbr.rel (%p211) target = $region20
      $region19: #{tpu_custom_call.1} parent=11 // pred_region
        _
      $region20: #{tpu_custom_call.1} parent=11 // pred_fallthru
        _
    $region12: #{tpu_custom_call.1} parent=5 // pred_fallthru
      _
    %p214 = scmp.lt.s32.totalorder %s11, 8
    // Predicated region
    $region21: #{tpu_custom_call.1} parent=5 // pred_check
      %p215 = pneg %p214
    $region22: #{tpu_custom_call.1} parent=5 // pred_check_branch
      %217 = sbr.rel (%p215) target = $region24
    $region23: #{tpu_custom_call.1} parent=5 // pred_region
      // Predicated region
      $region25: #{tpu_custom_call.1} parent=23 // pred_check
        %p218 = pneg %p53
      $region26: #{tpu_custom_call.1} parent=23 // pred_check_branch
        %220 = sbr.rel (%p218) target = $region28
      $region27: #{tpu_custom_call.1} parent=23 // pred_region
        %s221 = smul.u32 %s19, 4
        %s222 = ssub.s32 %s221, 1
        %p223 = scmp.gt.s32.totalorder %s222, 0
        %s224 = scalar_select %p223, %s222, 0
        %p225 = scmp.lt.s32.totalorder %s18, 1
        %s226 = scalar_select %p225, %s18, 1
        %p227 = scmp.lt.s32.totalorder %s224, 15
        %s228 = scalar_select %p227, %s224, 15
        %s229 = smul.addr %s228, 2
        %s230 = smul.addr %s226, 32
        %s231 = sadd.s32 %s229, %s230
        %s232 = smul.addr %s231, 8
        %s233 = scalar_lea.vmem %s0, %s232
        %s234 = smul.u32 %s19, 4
        %s235 = ssub.s32 %s234, 1
        %p236 = scmp.gt.s32.totalorder %s235, 0
        %s237 = scalar_select %p236, %s235, 0
      $region28: #{tpu_custom_call.1} parent=23 // pred_fallthru
        _
      // Predicated region
      $region29: #{tpu_custom_call.1} parent=23 // pred_check
        %p238 = pneg %p81
      $region30: #{tpu_custom_call.1} parent=23 // pred_check_branch
        %240 = sbr.rel (%p238) target = $region32
      $region31: #{tpu_custom_call.1} parent=23 // pred_region
        %s241 = smul.u32 4, %s19
        %p242 = scmp.lt.s32.totalorder %s18, 1
        %s243 = scalar_select %p242, %s18, 1
        %p244 = scmp.lt.s32.totalorder %s241, 15
        %s245 = scalar_select %p244, %s241, 15
        %s246 = smul.addr %s245, 2
        %s247 = smul.addr %s243, 32
        %s248 = sadd.s32 %s246, %s247
        %s249 = smul.addr %s248, 8
        %s250 = scalar_lea.vmem %s1, %s249
        %s251 = smul.u32 4, %s19
      $region32: #{tpu_custom_call.1} parent=23 // pred_fallthru
        _
      // Predicated region
      $region33: #{tpu_custom_call.1} parent=23 // pred_check
        %p252 = pneg %p117
      $region34: #{tpu_custom_call.1} parent=23 // pred_check_branch
        %254 = sbr.rel (%p252) target = $region36
      $region35: #{tpu_custom_call.1} parent=23 // pred_region
        %s255 = smul.u32 %s19, 4
        %s256 = sadd.s32 %s255, 4
        %p257 = scmp.lt.s32.totalorder %s256, 15
        %s258 = scalar_select %p257, %s256, 15
        %p259 = scmp.lt.s32.totalorder %s18, 1
        %s260 = scalar_select %p259, %s18, 1
        %p261 = scmp.lt.s32.totalorder %s258, 15
        %s262 = scalar_select %p261, %s258, 15
        %s263 = smul.addr %s262, 2
        %s264 = smul.addr %s260, 32
        %s265 = sadd.s32 %s263, %s264
        %s266 = smul.addr %s265, 8
        %s267 = scalar_lea.vmem %s2, %s266
        %s268 = smul.u32 %s19, 4
        %s269 = sadd.s32 %s268, 4
        %p270 = scmp.lt.s32.totalorder %s269, 15
        %s271 = scalar_select %p270, %s269, 15
      $region36: #{tpu_custom_call.1} parent=23 // pred_fallthru
        _
    $region24: #{tpu_custom_call.1} parent=5 // pred_fallthru
      _
    %p272 = scmp.le.s32.totalorder 1, %s11
    %p273 = scmp.lt.s32.totalorder %s11, 9
    %p274 = pnand %p272, %p273
    %p275 = pneg %p274
    // Predicated region
    $region37: #{tpu_custom_call.1} parent=5 // pred_check
      _
    $region38: #{tpu_custom_call.1} parent=5 // pred_check_branch
      %277 = sbr.rel (%p274) target = $region40
    $region39: #{tpu_custom_call.1} parent=5 // pred_region
      %s278 = ssub.s32 %s11, 1
      %s279 = smul.u32 %s21, 4
      %s280 = ssub.s32 %s279, 1
      %p281 = scmp.gt.s32.totalorder %s280, 0
      %s282 = scalar_select %p281, %s280, 0
      %p283 = scmp.lt.s32.totalorder %s20, 1
      %s284 = scalar_select %p283, %s20, 1
      %p285 = scmp.lt.s32.totalorder %s282, 15
      %s286 = scalar_select %p285, %s282, 15
      %s287 = smul.addr %s286, 2
      %s288 = smul.addr %s284, 32
      %s289 = sadd.s32 %s287, %s288
      %s290 = smul.addr %s289, 8
      %s291 = scalar_lea.vmem %s0, %s290
      %p292 = pneg %p59
      %p293 = pneg %p56
      %s294 = smul.u32 4, %s21
      %p295 = scmp.lt.s32.totalorder %s20, 1
      %s296 = scalar_select %p295, %s20, 1
      %p297 = scmp.lt.s32.totalorder %s294, 15
      %s298 = scalar_select %p297, %s294, 15
      %s299 = smul.addr %s298, 2
      %s300 = smul.addr %s296, 32
      %s301 = sadd.s32 %s299, %s300
      %s302 = smul.addr %s301, 8
      %s303 = scalar_lea.vmem %s1, %s302
      %p304 = pneg %p87
      %p305 = pneg %p84
      %s306 = smul.u32 %s21, 4
      %s307 = sadd.s32 %s306, 4
      %p308 = scmp.lt.s32.totalorder %s307, 15
      %s309 = scalar_select %p308, %s307, 15
      %p310 = scmp.lt.s32.totalorder %s20, 1
      %s311 = scalar_select %p310, %s20, 1
      %p312 = scmp.lt.s32.totalorder %s309, 15
      %s313 = scalar_select %p312, %s309, 15
      %s314 = smul.addr %s313, 2
      %s315 = smul.addr %s311, 32
      %s316 = sadd.s32 %s314, %s315
      %s317 = smul.addr %s316, 8
      %s318 = scalar_lea.vmem %s2, %s317
      %p319 = pneg %p123
      %p320 = pneg %p120
      %p321 = pneg %p144
      %p322 = pneg %p141
      %p323 = pneg %p165
      %p324 = pneg %p162
      %p325 = pneg %p193
      %p326 = pneg %p190
      %s327 = smul.u32 4, %s21
      %p328 = scmp.lt.s32.totalorder %s20, 1
      %s329 = scalar_select %p328, %s20, 1
      %p330 = scmp.lt.s32.totalorder %s327, 15
      %s331 = scalar_select %p330, %s327, 15
      %s332 = smul.addr %s331, 2
      %s333 = smul.addr %s329, 32
      %s334 = sadd.s32 %s332, %s333
      %s335 = smul.addr %s334, 8
      %s336 = scalar_lea.vmem %s5, %s335
      %s337 = smul.u32 %s21, 4
      %s338 = ssub.s32 %s337, 1
      %p339 = scmp.gt.s32.totalorder %s338, 0
      %s340 = scalar_select %p339, %s338, 0
      %p341 = scmp.lt.s32.totalorder %s20, 1
      %s342 = scalar_select %p341, %s20, 1
      %p343 = scmp.lt.s32.totalorder %s340, 15
      %s344 = scalar_select %p343, %s340, 15
      %s345 = smul.addr %s344, 2
      %s346 = smul.addr %s342, 32
      %s347 = sadd.s32 %s345, %s346
      %s348 = smul.addr %s347, 8
      %s349 = scalar_lea.vmem %s0, %s348
      %s350 = smul.u32 %s21, 4
      %s351 = ssub.s32 %s350, 1
      %p352 = scmp.gt.s32.totalorder %s351, 0
      %s353 = scalar_select %p352, %s351, 0
      %s354 = smul.u32 4, %s21
      %p355 = scmp.lt.s32.totalorder %s20, 1
      %s356 = scalar_select %p355, %s20, 1
      %p357 = scmp.lt.s32.totalorder %s354, 15
      %s358 = scalar_select %p357, %s354, 15
      %s359 = smul.addr %s358, 2
      %s360 = smul.addr %s356, 32
      %s361 = sadd.s32 %s359, %s360
      %s362 = smul.addr %s361, 8
      %s363 = scalar_lea.vmem %s1, %s362
      %s364 = smul.u32 4, %s21
      %s365 = smul.u32 %s21, 4
      %s366 = sadd.s32 %s365, 4
      %p367 = scmp.lt.s32.totalorder %s366, 15
      %s368 = scalar_select %p367, %s366, 15
      %p369 = scmp.lt.s32.totalorder %s20, 1
      %s370 = scalar_select %p369, %s20, 1
      %p371 = scmp.lt.s32.totalorder %s368, 15
      %s372 = scalar_select %p371, %s368, 15
      %s373 = smul.addr %s372, 2
      %s374 = smul.addr %s370, 32
      %s375 = sadd.s32 %s373, %s374
      %s376 = smul.addr %s375, 8
      %s377 = scalar_lea.vmem %s2, %s376
      %s378 = smul.u32 %s21, 4
      %s379 = sadd.s32 %s378, 4
      %p380 = scmp.lt.s32.totalorder %s379, 15
      %s381 = scalar_select %p380, %s379, 15
      %s382 = smul.u32 4, %s21
      %p383 = scmp.lt.s32.totalorder %s20, 1
      %s384 = scalar_select %p383, %s20, 1
      %p385 = scmp.lt.s32.totalorder %s382, 15
      %s386 = scalar_select %p385, %s382, 15
      %s387 = smul.addr %s386, 2
      %s388 = smul.addr %s384, 32
      %s389 = sadd.s32 %s387, %s388
      %s390 = smul.addr %s389, 8
      %s391 = scalar_lea.vmem %s5, %s390
      %s392 = smul.u32 4, %s21
      %v393 = vld [vmem:[%s363] sm:$0xff]
      %v394 = vld [vmem:[%s363 + $0x8] sm:$0xff]
      %v395 = vld [vmem:[%s363 + $0x10] sm:$0xff]
      %v396 = vld [vmem:[%s363 + $0x18] sm:$0xff]
      %v397 = vld [vmem:[%s363 + $0x20] sm:$0xff]
      %v398 = vld [vmem:[%s363 + $0x28] sm:$0xff]
      %v399 = vld [vmem:[%s363 + $0x30] sm:$0xff]
      %v400 = vld [vmem:[%s363 + $0x38] sm:$0xff]
      %p401 = scmp.gt.s32.totalorder %s21, 0
      %v402 = vld [vmem:[%s349] sm:$0xff]
      %v403 = vld [vmem:[%s349 + $0x8] sm:$0xff]
      %s404 = scalar_select %p401, 1, 0
      %v405 = vstv %s404
      %vm406 = vcmp.eq.s32.totalorder %v405, 1
      %v407 = vsel %vm406, %v402, 0.0
      %v408 = vsel %vm406, %v403, 0.0
      %p409 = scmp.lt.s32.totalorder %s21, 3
      %v410 = vld [vmem:[%s377] sm:$0xff]
      %v411 = vld [vmem:[%s377 + $0x8] sm:$0xff]
      %s412 = scalar_select %p409, 1, 0
      %v413 = vstv %s412
      %vm414 = vcmp.eq.s32.totalorder %v413, 1
      %v415 = vsel %vm414, %v410, 0.0
      %v416 = vsel %vm414, %v411, 0.0
      %v417 = vld [vmem:[%s3] sm:$0xf]
      %s418 = scalar_lea.vmem %s3, 4
      %v419 = vld [vmem:[%s418] sm:$0xf]
      %s420 = scalar_lea.vmem %s3, 8
      %v421 = vld [vmem:[%s420] sm:$0xf]
      %s422 = scalar_lea.vmem %s3, 12
      %v423 = vld [vmem:[%s422] sm:$0xf]
      %vm424 = vcmask 31744
      %v426 = vsel %vm424, %v393, 0
      %v429 = vsel %vm424, %v394, 0
      %v432 = vsel %vm424, %v395, 0
      %v435 = vsel %vm424, %v396, 0
      %v438 = vsel %vm424, %v397, 0
      %v441 = vsel %vm424, %v398, 0
      %v444 = vsel %vm424, %v399, 0
      %v447 = vsel %vm424, %v400, 0
      %vm449 = vcmask 1043456
      %v451 = vsel %vm449, %v423, 0
      %453 = vmatpush.msra.mxu0 0.0
      %454 = vmatpush.msra.mxu0 0.0
      %455 = vmatpush.msra.mxu0 0.0
      %456 = vmatpush.msra.mxu0 0.0
      %457 = vmatpush.msra.mxu0 0.0
      %458 = vmatpush.msra.mxu0 0.0
      %459 = vmatpush.msra.mxu0 0.0
      %460 = vmatpush.msra.mxu0 0.0
      %461 = vmatpush.msra.mxu0 0.0
      %462 = vmatpush.msra.mxu0 0.0
      %463 = vmatpush.msra.mxu0 0.0
      %464 = vmatpush.msra.mxu0 0.0
      %465 = vmatpush.msra.mxu0 0.0
      %466 = vmatpush.msra.mxu0 0.0
      %467 = vmatpush.msra.mxu0 0.0
      %468 = vmatpush.msra.mxu0 %v451
      %469 = vmatmul.f32.gmra.mxu0 %v426
      %v470 = vpop.f32.mrf.mxu0
      %v471 = vadd.f32 0.0, %v470
      %472 = vmatmul.f32.gmra.mxu0 %v429
      %v473 = vpop.f32.mrf.mxu0
      %v474 = vadd.f32 0.0, %v473
      %475 = vmatmul.f32.gmra.mxu0 %v432
      %v476 = vpop.f32.mrf.mxu0
      %v477 = vadd.f32 0.0, %v476
      %478 = vmatmul.f32.gmra.mxu0 %v435
      %v479 = vpop.f32.mrf.mxu0
      %v480 = vadd.f32 0.0, %v479
      %481 = vmatmul.f32.gmra.mxu0 %v438
      %v482 = vpop.f32.mrf.mxu0
      %v483 = vadd.f32 0.0, %v482
      %484 = vmatmul.f32.gmra.mxu0 %v441
      %v485 = vpop.f32.mrf.mxu0
      %v486 = vadd.f32 0.0, %v485
      %487 = vmatmul.f32.gmra.mxu0 %v444
      %v488 = vpop.f32.mrf.mxu0
      %v489 = vadd.f32 0.0, %v488
      %490 = vmatmul.f32.gmra.mxu0 %v447
      %v491 = vpop.f32.mrf.mxu0
      %v492 = vadd.f32 0.0, %v491
      %493 = vdwg.mxu0
      %v495 = vsel %vm424, %v407, 0
      %v498 = vsel %vm424, %v408, 0
      %v501 = vsel %vm449, %v417, 0
      %503 = vmatpush.msra.mxu0 0.0
      %504 = vmatpush.msra.mxu0 0.0
      %505 = vmatpush.msra.mxu0 0.0
      %506 = vmatpush.msra.mxu0 0.0
      %507 = vmatpush.msra.mxu0 0.0
      %508 = vmatpush.msra.mxu0 0.0
      %509 = vmatpush.msra.mxu0 0.0
      %510 = vmatpush.msra.mxu0 0.0
      %511 = vmatpush.msra.mxu0 0.0
      %512 = vmatpush.msra.mxu0 0.0
      %513 = vmatpush.msra.mxu0 0.0
      %514 = vmatpush.msra.mxu0 0.0
      %515 = vmatpush.msra.mxu0 0.0
      %516 = vmatpush.msra.mxu0 0.0
      %517 = vmatpush.msra.mxu0 0.0
      %518 = vmatpush.msra.mxu0 %v501
      %519 = vmatmul.f32.gmra.mxu0 %v495
      %v520 = vpop.f32.mrf.mxu0
      %v521 = vadd.f32 %v471, %v520
      %522 = vmatmul.f32.gmra.mxu0 %v498
      %v523 = vpop.f32.mrf.mxu0
      %v524 = vadd.f32 %v474, %v523
      %525 = vmatmul.f32.gmra.mxu0 %v426
      %v526 = vpop.f32.mrf.mxu0
      %v527 = vadd.f32 %v477, %v526
      %528 = vmatmul.f32.gmra.mxu0 %v429
      %v529 = vpop.f32.mrf.mxu0
      %v530 = vadd.f32 %v480, %v529
      %531 = vmatmul.f32.gmra.mxu0 %v432
      %v532 = vpop.f32.mrf.mxu0
      %v533 = vadd.f32 %v483, %v532
      %534 = vmatmul.f32.gmra.mxu0 %v435
      %v535 = vpop.f32.mrf.mxu0
      %v536 = vadd.f32 %v486, %v535
      %537 = vmatmul.f32.gmra.mxu0 %v438
      %v538 = vpop.f32.mrf.mxu0
      %v539 = vadd.f32 %v489, %v538
      %540 = vmatmul.f32.gmra.mxu0 %v441
      %v541 = vpop.f32.mrf.mxu0
      %v542 = vadd.f32 %v492, %v541
      %543 = vdwg.mxu0
      %s544 = scalar_lea.vmem %s3, 16
      %v545 = vld [vmem:[%s544] sm:$0xf]
      %v547 = vsel %vm449, %v545, 0
      %549 = vmatpush.msra.mxu0 0.0
      %550 = vmatpush.msra.mxu0 0.0
      %551 = vmatpush.msra.mxu0 0.0
      %552 = vmatpush.msra.mxu0 0.0
      %553 = vmatpush.msra.mxu0 0.0
      %554 = vmatpush.msra.mxu0 0.0
      %555 = vmatpush.msra.mxu0 0.0
      %556 = vmatpush.msra.mxu0 0.0
      %557 = vmatpush.msra.mxu0 0.0
      %558 = vmatpush.msra.mxu0 0.0
      %559 = vmatpush.msra.mxu0 0.0
      %560 = vmatpush.msra.mxu0 0.0
      %561 = vmatpush.msra.mxu0 0.0
      %562 = vmatpush.msra.mxu0 0.0
      %563 = vmatpush.msra.mxu0 0.0
      %564 = vmatpush.msra.mxu0 %v547
      %565 = vmatmul.f32.gmra.mxu0 %v426
      %v566 = vpop.f32.mrf.mxu0
      %v567 = vadd.f32 0.0, %v566
      %568 = vmatmul.f32.gmra.mxu0 %v429
      %v569 = vpop.f32.mrf.mxu0
      %v570 = vadd.f32 0.0, %v569
      %571 = vmatmul.f32.gmra.mxu0 %v432
      %v572 = vpop.f32.mrf.mxu0
      %v573 = vadd.f32 0.0, %v572
      %574 = vmatmul.f32.gmra.mxu0 %v435
      %v575 = vpop.f32.mrf.mxu0
      %v576 = vadd.f32 0.0, %v575
      %577 = vmatmul.f32.gmra.mxu0 %v438
      %v578 = vpop.f32.mrf.mxu0
      %v579 = vadd.f32 0.0, %v578
      %580 = vmatmul.f32.gmra.mxu0 %v441
      %v581 = vpop.f32.mrf.mxu0
      %v582 = vadd.f32 0.0, %v581
      %583 = vmatmul.f32.gmra.mxu0 %v444
      %v584 = vpop.f32.mrf.mxu0
      %v585 = vadd.f32 0.0, %v584
      %586 = vmatmul.f32.gmra.mxu0 %v447
      %v587 = vpop.f32.mrf.mxu0
      %v588 = vadd.f32 0.0, %v587
      %589 = vdwg.mxu0
      %v591 = vsel %vm449, %v419, 0
      %593 = vmatpush.msra.mxu0 0.0
      %594 = vmatpush.msra.mxu0 0.0
      %595 = vmatpush.msra.mxu0 0.0
      %596 = vmatpush.msra.mxu0 0.0
      %597 = vmatpush.msra.mxu0 0.0
      %598 = vmatpush.msra.mxu0 0.0
      %599 = vmatpush.msra.mxu0 0.0
      %600 = vmatpush.msra.mxu0 0.0
      %601 = vmatpush.msra.mxu0 0.0
      %602 = vmatpush.msra.mxu0 0.0
      %603 = vmatpush.msra.mxu0 0.0
      %604 = vmatpush.msra.mxu0 0.0
      %605 = vmatpush.msra.mxu0 0.0
      %606 = vmatpush.msra.mxu0 0.0
      %607 = vmatpush.msra.mxu0 0.0
      %608 = vmatpush.msra.mxu0 %v591
      %609 = vmatmul.f32.gmra.mxu0 %v495
      %v610 = vpop.f32.mrf.mxu0
      %v611 = vadd.f32 %v567, %v610
      %612 = vmatmul.f32.gmra.mxu0 %v498
      %v613 = vpop.f32.mrf.mxu0
      %v614 = vadd.f32 %v570, %v613
      %615 = vmatmul.f32.gmra.mxu0 %v426
      %v616 = vpop.f32.mrf.mxu0
      %v617 = vadd.f32 %v573, %v616
      %618 = vmatmul.f32.gmra.mxu0 %v429
      %v619 = vpop.f32.mrf.mxu0
      %v620 = vadd.f32 %v576, %v619
      %621 = vmatmul.f32.gmra.mxu0 %v432
      %v622 = vpop.f32.mrf.mxu0
      %v623 = vadd.f32 %v579, %v622
      %624 = vmatmul.f32.gmra.mxu0 %v435
      %v625 = vpop.f32.mrf.mxu0
      %v626 = vadd.f32 %v582, %v625
      %627 = vmatmul.f32.gmra.mxu0 %v438
      %v628 = vpop.f32.mrf.mxu0
      %v629 = vadd.f32 %v585, %v628
      %630 = vmatmul.f32.gmra.mxu0 %v441
      %v631 = vpop.f32.mrf.mxu0
      %v632 = vadd.f32 %v588, %v631
      %633 = vdwg.mxu0
      %s634 = scalar_lea.vmem %s3, 20
      %v635 = vld [vmem:[%s634] sm:$0xf]
      %v637 = vsel %vm449, %v635, 0
      %639 = vmatpush.msra.mxu0 0.0
      %640 = vmatpush.msra.mxu0 0.0
      %641 = vmatpush.msra.mxu0 0.0
      %642 = vmatpush.msra.mxu0 0.0
      %643 = vmatpush.msra.mxu0 0.0
      %644 = vmatpush.msra.mxu0 0.0
      %645 = vmatpush.msra.mxu0 0.0
      %646 = vmatpush.msra.mxu0 0.0
      %647 = vmatpush.msra.mxu0 0.0
      %648 = vmatpush.msra.mxu0 0.0
      %649 = vmatpush.msra.mxu0 0.0
      %650 = vmatpush.msra.mxu0 0.0
      %651 = vmatpush.msra.mxu0 0.0
      %652 = vmatpush.msra.mxu0 0.0
      %653 = vmatpush.msra.mxu0 0.0
      %654 = vmatpush.msra.mxu0 %v637
      %655 = vmatmul.f32.gmra.mxu0 %v426
      %v656 = vpop.f32.mrf.mxu0
      %v657 = vadd.f32 0.0, %v656
      %658 = vmatmul.f32.gmra.mxu0 %v429
      %v659 = vpop.f32.mrf.mxu0
      %v660 = vadd.f32 0.0, %v659
      %661 = vmatmul.f32.gmra.mxu0 %v432
      %v662 = vpop.f32.mrf.mxu0
      %v663 = vadd.f32 0.0, %v662
      %664 = vmatmul.f32.gmra.mxu0 %v435
      %v665 = vpop.f32.mrf.mxu0
      %v666 = vadd.f32 0.0, %v665
      %667 = vmatmul.f32.gmra.mxu0 %v438
      %v668 = vpop.f32.mrf.mxu0
      %v669 = vadd.f32 0.0, %v668
      %670 = vmatmul.f32.gmra.mxu0 %v441
      %v671 = vpop.f32.mrf.mxu0
      %v672 = vadd.f32 0.0, %v671
      %673 = vmatmul.f32.gmra.mxu0 %v444
      %v674 = vpop.f32.mrf.mxu0
      %v675 = vadd.f32 0.0, %v674
      %676 = vmatmul.f32.gmra.mxu0 %v447
      %v677 = vpop.f32.mrf.mxu0
      %v678 = vadd.f32 0.0, %v677
      %679 = vdwg.mxu0
      %v681 = vsel %vm449, %v421, 0
      %683 = vmatpush.msra.mxu0 0.0
      %684 = vmatpush.msra.mxu0 0.0
      %685 = vmatpush.msra.mxu0 0.0
      %686 = vmatpush.msra.mxu0 0.0
      %687 = vmatpush.msra.mxu0 0.0
      %688 = vmatpush.msra.mxu0 0.0
      %689 = vmatpush.msra.mxu0 0.0
      %690 = vmatpush.msra.mxu0 0.0
      %691 = vmatpush.msra.mxu0 0.0
      %692 = vmatpush.msra.mxu0 0.0
      %693 = vmatpush.msra.mxu0 0.0
      %694 = vmatpush.msra.mxu0 0.0
      %695 = vmatpush.msra.mxu0 0.0
      %696 = vmatpush.msra.mxu0 0.0
      %697 = vmatpush.msra.mxu0 0.0
      %698 = vmatpush.msra.mxu0 %v681
      %699 = vmatmul.f32.gmra.mxu0 %v495
      %v700 = vpop.f32.mrf.mxu0
      %v701 = vadd.f32 %v657, %v700
      %702 = vmatmul.f32.gmra.mxu0 %v498
      %v703 = vpop.f32.mrf.mxu0
      %v704 = vadd.f32 %v660, %v703
      %705 = vmatmul.f32.gmra.mxu0 %v426
      %v706 = vpop.f32.mrf.mxu0
      %v707 = vadd.f32 %v663, %v706
      %708 = vmatmul.f32.gmra.mxu0 %v429
      %v709 = vpop.f32.mrf.mxu0
      %v710 = vadd.f32 %v666, %v709
      %711 = vmatmul.f32.gmra.mxu0 %v432
      %v712 = vpop.f32.mrf.mxu0
      %v713 = vadd.f32 %v669, %v712
      %714 = vmatmul.f32.gmra.mxu0 %v435
      %v715 = vpop.f32.mrf.mxu0
      %v716 = vadd.f32 %v672, %v715
      %717 = vmatmul.f32.gmra.mxu0 %v438
      %v718 = vpop.f32.mrf.mxu0
      %v719 = vadd.f32 %v675, %v718
      %720 = vmatmul.f32.gmra.mxu0 %v441
      %v721 = vpop.f32.mrf.mxu0
      %v722 = vadd.f32 %v678, %v721
      %723 = vdwg.mxu0
      %s724 = scalar_lea.vmem %s3, 24
      %v725 = vld [vmem:[%s724] sm:$0xf]
      %v727 = vsel %vm424, %v415, 0
      %v730 = vsel %vm424, %v416, 0
      %v733 = vsel %vm449, %v725, 0
      %735 = vmatpush.msra.mxu0 0.0
      %736 = vmatpush.msra.mxu0 0.0
      %737 = vmatpush.msra.mxu0 0.0
      %738 = vmatpush.msra.mxu0 0.0
      %739 = vmatpush.msra.mxu0 0.0
      %740 = vmatpush.msra.mxu0 0.0
      %741 = vmatpush.msra.mxu0 0.0
      %742 = vmatpush.msra.mxu0 0.0
      %743 = vmatpush.msra.mxu0 0.0
      %744 = vmatpush.msra.mxu0 0.0
      %745 = vmatpush.msra.mxu0 0.0
      %746 = vmatpush.msra.mxu0 0.0
      %747 = vmatpush.msra.mxu0 0.0
      %748 = vmatpush.msra.mxu0 0.0
      %749 = vmatpush.msra.mxu0 0.0
      %750 = vmatpush.msra.mxu0 %v733
      %751 = vmatmul.f32.gmra.mxu0 %v432
      %v752 = vpop.f32.mrf.mxu0
      %v753 = vadd.f32 0.0, %v752
      %754 = vmatmul.f32.gmra.mxu0 %v435
      %v755 = vpop.f32.mrf.mxu0
      %v756 = vadd.f32 0.0, %v755
      %757 = vmatmul.f32.gmra.mxu0 %v438
      %v758 = vpop.f32.mrf.mxu0
      %v759 = vadd.f32 0.0, %v758
      %760 = vmatmul.f32.gmra.mxu0 %v441
      %v761 = vpop.f32.mrf.mxu0
      %v762 = vadd.f32 0.0, %v761
      %763 = vmatmul.f32.gmra.mxu0 %v444
      %v764 = vpop.f32.mrf.mxu0
      %v765 = vadd.f32 0.0, %v764
      %766 = vmatmul.f32.gmra.mxu0 %v447
      %v767 = vpop.f32.mrf.mxu0
      %v768 = vadd.f32 0.0, %v767
      %769 = vmatmul.f32.gmra.mxu0 %v727
      %v770 = vpop.f32.mrf.mxu0
      %v771 = vadd.f32 0.0, %v770
      %772 = vmatmul.f32.gmra.mxu0 %v730
      %v773 = vpop.f32.mrf.mxu0
      %v774 = vadd.f32 0.0, %v773
      %775 = vdwg.mxu0
      %v776 = vadd.f32 %v521, %v753
      %v777 = vadd.f32 %v524, %v756
      %v778 = vadd.f32 %v527, %v759
      %v779 = vadd.f32 %v530, %v762
      %v780 = vadd.f32 %v533, %v765
      %v781 = vadd.f32 %v536, %v768
      %v782 = vadd.f32 %v539, %v771
      %v783 = vadd.f32 %v542, %v774
      %s784 = scalar_lea.vmem %s3, 28
      %v785 = vld [vmem:[%s784] sm:$0xf]
      %v787 = vsel %vm449, %v785, 0
      %789 = vmatpush.msra.mxu0 0.0
      %790 = vmatpush.msra.mxu0 0.0
      %791 = vmatpush.msra.mxu0 0.0
      %792 = vmatpush.msra.mxu0 0.0
      %793 = vmatpush.msra.mxu0 0.0
      %794 = vmatpush.msra.mxu0 0.0
      %795 = vmatpush.msra.mxu0 0.0
      %796 = vmatpush.msra.mxu0 0.0
      %797 = vmatpush.msra.mxu0 0.0
      %798 = vmatpush.msra.mxu0 0.0
      %799 = vmatpush.msra.mxu0 0.0
      %800 = vmatpush.msra.mxu0 0.0
      %801 = vmatpush.msra.mxu0 0.0
      %802 = vmatpush.msra.mxu0 0.0
      %803 = vmatpush.msra.mxu0 0.0
      %804 = vmatpush.msra.mxu0 %v787
      %805 = vmatmul.f32.gmra.mxu0 %v432
      %v806 = vpop.f32.mrf.mxu0
      %v807 = vadd.f32 0.0, %v806
      %808 = vmatmul.f32.gmra.mxu0 %v435
      %v809 = vpop.f32.mrf.mxu0
      %v810 = vadd.f32 0.0, %v809
      %811 = vmatmul.f32.gmra.mxu0 %v438
      %v812 = vpop.f32.mrf.mxu0
      %v813 = vadd.f32 0.0, %v812
      %814 = vmatmul.f32.gmra.mxu0 %v441
      %v815 = vpop.f32.mrf.mxu0
      %v816 = vadd.f32 0.0, %v815
      %817 = vmatmul.f32.gmra.mxu0 %v444
      %v818 = vpop.f32.mrf.mxu0
      %v819 = vadd.f32 0.0, %v818
      %820 = vmatmul.f32.gmra.mxu0 %v447
      %v821 = vpop.f32.mrf.mxu0
      %v822 = vadd.f32 0.0, %v821
      %823 = vmatmul.f32.gmra.mxu0 %v727
      %v824 = vpop.f32.mrf.mxu0
      %v825 = vadd.f32 0.0, %v824
      %826 = vmatmul.f32.gmra.mxu0 %v730
      %v827 = vpop.f32.mrf.mxu0
      %v828 = vadd.f32 0.0, %v827
      %829 = vdwg.mxu0
      %v830 = vadd.f32 %v611, %v807
      %v831 = vadd.f32 %v614, %v810
      %v832 = vadd.f32 %v617, %v813
      %v833 = vadd.f32 %v620, %v816
      %v834 = vadd.f32 %v623, %v819
      %v835 = vadd.f32 %v626, %v822
      %v836 = vadd.f32 %v629, %v825
      %v837 = vadd.f32 %v632, %v828
      %s838 = scalar_lea.vmem %s3, 32
      %v839 = vld [vmem:[%s838] sm:$0xf]
      %v841 = vsel %vm449, %v839, 0
      %843 = vmatpush.msra.mxu0 0.0
      %844 = vmatpush.msra.mxu0 0.0
      %845 = vmatpush.msra.mxu0 0.0
      %846 = vmatpush.msra.mxu0 0.0
      %847 = vmatpush.msra.mxu0 0.0
      %848 = vmatpush.msra.mxu0 0.0
      %849 = vmatpush.msra.mxu0 0.0
      %850 = vmatpush.msra.mxu0 0.0
      %851 = vmatpush.msra.mxu0 0.0
      %852 = vmatpush.msra.mxu0 0.0
      %853 = vmatpush.msra.mxu0 0.0
      %854 = vmatpush.msra.mxu0 0.0
      %855 = vmatpush.msra.mxu0 0.0
      %856 = vmatpush.msra.mxu0 0.0
      %857 = vmatpush.msra.mxu0 0.0
      %858 = vmatpush.msra.mxu0 %v841
      %859 = vmatmul.f32.gmra.mxu0 %v432
      %v860 = vpop.f32.mrf.mxu0
      %v861 = vadd.f32 0.0, %v860
      %862 = vmatmul.f32.gmra.mxu0 %v435
      %v863 = vpop.f32.mrf.mxu0
      %v864 = vadd.f32 0.0, %v863
      %865 = vmatmul.f32.gmra.mxu0 %v438
      %v866 = vpop.f32.mrf.mxu0
      %v867 = vadd.f32 0.0, %v866
      %868 = vmatmul.f32.gmra.mxu0 %v441
      %v869 = vpop.f32.mrf.mxu0
      %v870 = vadd.f32 0.0, %v869
      %871 = vmatmul.f32.gmra.mxu0 %v444
      %v872 = vpop.f32.mrf.mxu0
      %v873 = vadd.f32 0.0, %v872
      %874 = vmatmul.f32.gmra.mxu0 %v447
      %v875 = vpop.f32.mrf.mxu0
      %v876 = vadd.f32 0.0, %v875
      %877 = vmatmul.f32.gmra.mxu0 %v727
      %v878 = vpop.f32.mrf.mxu0
      %v879 = vadd.f32 0.0, %v878
      %880 = vmatmul.f32.gmra.mxu0 %v730
      %v881 = vpop.f32.mrf.mxu0
      %v882 = vadd.f32 0.0, %v881
      %883 = vdwg.mxu0
      %v884 = vadd.f32 %v701, %v861
      %v885 = vadd.f32 %v704, %v864
      %v886 = vadd.f32 %v707, %v867
      %v887 = vadd.f32 %v710, %v870
      %v888 = vadd.f32 %v713, %v873
      %v889 = vadd.f32 %v716, %v876
      %v890 = vadd.f32 %v719, %v879
      %v891 = vadd.f32 %v722, %v882
      %v892 = vlaneseq
      %v893 = vshrl.u32 %v892, 7
      %v894 = vadd.s32 %v893, 8
      %v895 = vadd.s32 %v893, 16
      %v896 = vadd.s32 %v893, 24
      %v897 = vadd.s32 %v893, 32
      %v898 = vadd.s32 %v893, 40
      %v899 = vadd.s32 %v893, 48
      %v900 = vadd.s32 %v893, 56
      %vm901 = vcmp.lt.s32.totalorder %v893, 0
      %v902 = vsub.s32 0, %v893
      %v903 = vsel %vm901, %v902, %v893
      %v904 = vshrl.u32 %v903, 4
      %v905 = vand.u32 %v903, 15
      %v906 = vsub.s32 0, %v905
      %v907 = vsel %vm901, %v906, %v905
      %vm908 = vcmp.lt.s32.totalorder %v894, 0
      %v909 = vsub.s32 0, %v894
      %v910 = vsel %vm908, %v909, %v894
      %v911 = vshrl.u32 %v910, 4
      %v912 = vand.u32 %v910, 15
      %v913 = vsub.s32 0, %v912
      %v914 = vsel %vm908, %v913, %v912
      %vm915 = vcmp.lt.s32.totalorder %v895, 0
      %v916 = vsub.s32 0, %v895
      %v917 = vsel %vm915, %v916, %v895
      %v918 = vshrl.u32 %v917, 4
      %v919 = vand.u32 %v917, 15
      %v920 = vsub.s32 0, %v919
      %v921 = vsel %vm915, %v920, %v919
      %vm922 = vcmp.lt.s32.totalorder %v896, 0
      %v923 = vsub.s32 0, %v896
      %v924 = vsel %vm922, %v923, %v896
      %v925 = vshrl.u32 %v924, 4
      %v926 = vand.u32 %v924, 15
      %v927 = vsub.s32 0, %v926
      %v928 = vsel %vm922, %v927, %v926
      %vm929 = vcmp.lt.s32.totalorder %v897, 0
      %v930 = vsub.s32 0, %v897
      %v931 = vsel %vm929, %v930, %v897
      %v932 = vshrl.u32 %v931, 4
      %v933 = vand.u32 %v931, 15
      %v934 = vsub.s32 0, %v933
      %v935 = vsel %vm929, %v934, %v933
      %vm936 = vcmp.lt.s32.totalorder %v898, 0
      %v937 = vsub.s32 0, %v898
      %v938 = vsel %vm936, %v937, %v898
      %v939 = vshrl.u32 %v938, 4
      %v940 = vand.u32 %v938, 15
      %v941 = vsub.s32 0, %v940
      %v942 = vsel %vm936, %v941, %v940
      %vm943 = vcmp.lt.s32.totalorder %v899, 0
      %v944 = vsub.s32 0, %v899
      %v945 = vsel %vm943, %v944, %v899
      %v946 = vshrl.u32 %v945, 4
      %v947 = vand.u32 %v945, 15
      %v948 = vsub.s32 0, %v947
      %v949 = vsel %vm943, %v948, %v947
      %vm950 = vcmp.lt.s32.totalorder %v900, 0
      %v951 = vsub.s32 0, %v900
      %v952 = vsel %vm950, %v951, %v900
      %v953 = vshrl.u32 %v952, 4
      %v954 = vand.u32 %v952, 15
      %v955 = vsub.s32 0, %v954
      %v956 = vsel %vm950, %v955, %v954
      %vm957 = vcmp.ne.s32.totalorder %v907, 0
      %vm958 = vcmp.ne.s32.totalorder %v914, 0
      %vm959 = vcmp.ne.s32.totalorder %v921, 0
      %vm960 = vcmp.ne.s32.totalorder %v928, 0
      %vm961 = vcmp.ne.s32.totalorder %v935, 0
      %vm962 = vcmp.ne.s32.totalorder %v942, 0
      %vm963 = vcmp.ne.s32.totalorder %v949, 0
      %vm964 = vcmp.ne.s32.totalorder %v956, 0
      %vm965 = vcmp.lt.s32.totalorder %v907, 0
      %vm966 = vcmp.lt.s32.totalorder %v914, 0
      %vm967 = vcmp.lt.s32.totalorder %v921, 0
      %vm968 = vcmp.lt.s32.totalorder %v928, 0
      %vm969 = vcmp.lt.s32.totalorder %v935, 0
      %vm970 = vcmp.lt.s32.totalorder %v942, 0
      %vm971 = vcmp.lt.s32.totalorder %v949, 0
      %vm972 = vcmp.lt.s32.totalorder %v956, 0
      %vm973 = vmand %vm965, %vm957
      %vm974 = vmand %vm966, %vm958
      %vm975 = vmand %vm967, %vm959
      %vm976 = vmand %vm968, %vm960
      %vm977 = vmand %vm969, %vm961
      %vm978 = vmand %vm970, %vm962
      %vm979 = vmand %vm971, %vm963
      %vm980 = vmand %vm972, %vm964
      %v981 = vadd.s32 %v907, 16
      %v982 = vadd.s32 %v914, 16
      %v983 = vadd.s32 %v921, 16
      %v984 = vadd.s32 %v928, 16
      %v985 = vadd.s32 %v935, 16
      %v986 = vadd.s32 %v942, 16
      %v987 = vadd.s32 %v949, 16
      %v988 = vadd.s32 %v956, 16
      %v989 = vsel %vm973, %v981, %v907
      %v990 = vsel %vm974, %v982, %v914
      %v991 = vsel %vm975, %v983, %v921
      %v992 = vsel %vm976, %v984, %v928
      %v993 = vsel %vm977, %v985, %v935
      %v994 = vsel %vm978, %v986, %v942
      %v995 = vsel %vm979, %v987, %v949
      %v996 = vsel %vm980, %v988, %v956
      %v997 = vld [vmem:[%s4] sm:$0x1]
      %v999 = vperm.slane %v997, 0
      %v1001 = vadd.f32 %v830, %v999
      %v1002 = vadd.f32 %v831, %v999
      %v1003 = vadd.f32 %v832, %v999
      %v1004 = vadd.f32 %v833, %v999
      %v1005 = vadd.f32 %v834, %v999
      %v1006 = vadd.f32 %v835, %v999
      %v1007 = vadd.f32 %v836, %v999
      %v1008 = vadd.f32 %v837, %v999
      %vm1009 = vcmp.eq.s32.totalorder %v989, 0
      %vm1010 = vcmp.eq.s32.totalorder %v990, 0
      %vm1011 = vcmp.eq.s32.totalorder %v991, 0
      %vm1012 = vcmp.eq.s32.totalorder %v992, 0
      %vm1013 = vcmp.eq.s32.totalorder %v993, 0
      %vm1014 = vcmp.eq.s32.totalorder %v994, 0
      %vm1015 = vcmp.eq.s32.totalorder %v995, 0
      %vm1016 = vcmp.eq.s32.totalorder %v996, 0
      %v1017 = vrot.slane %v776, 7
      %v1018 = vrot.slane %v777, 7
      %v1019 = vrot.slane %v778, 7
      %v1020 = vrot.slane %v779, 7
      %v1021 = vrot.slane %v780, 7
      %v1022 = vrot.slane %v781, 7
      %v1023 = vrot.slane %v782, 7
      %v1024 = vrot.slane %v783, 7
      %vm1025 = vcmp.lt.s32.totalorder %v893, 1
      %v1026 = vsel %vm1025, %v1023, %v1024
      %v1027 = vsel %vm1025, %v1022, %v1023
      %v1028 = vsel %vm1025, %v1021, %v1022
      %v1029 = vsel %vm1025, %v1020, %v1021
      %v1030 = vsel %vm1025, %v1019, %v1020
      %v1031 = vsel %vm1025, %v1018, %v1019
      %v1032 = vsel %vm1025, %v1017, %v1018
      %v1033 = vsel %vm1025, %v1024, %v1017
      %v1034 = vsel %vm1009, 1, 0
      %v1035 = vsel %vm1010, 1, 0
      %v1036 = vsel %vm1011, 1, 0
      %v1037 = vsel %vm1012, 1, 0
      %v1038 = vsel %vm1013, 1, 0
      %v1039 = vsel %vm1014, 1, 0
      %v1040 = vsel %vm1015, 1, 0
      %v1041 = vsel %vm1016, 1, 0
      %vm1042 = vcmp.eq.s32.totalorder %v1034, 1
      %vm1043 = vcmp.eq.s32.totalorder %v1035, 1
      %vm1044 = vcmp.eq.s32.totalorder %v1036, 1
      %vm1045 = vcmp.eq.s32.totalorder %v1037, 1
      %vm1046 = vcmp.eq.s32.totalorder %v1038, 1
      %vm1047 = vcmp.eq.s32.totalorder %v1039, 1
      %vm1048 = vcmp.eq.s32.totalorder %v1040, 1
      %vm1049 = vcmp.eq.s32.totalorder %v1041, 1
      %v1050 = vsel %vm1042, 0.0, %v1033
      %v1051 = vsel %vm1043, 0.0, %v1032
      %v1052 = vsel %vm1044, 0.0, %v1031
      %v1053 = vsel %vm1045, 0.0, %v1030
      %v1054 = vsel %vm1046, 0.0, %v1029
      %v1055 = vsel %vm1047, 0.0, %v1028
      %v1056 = vsel %vm1048, 0.0, %v1027
      %v1057 = vsel %vm1049, 0.0, %v1026
      %v1058 = vadd.f32 %v1001, %v1050
      %v1059 = vadd.f32 %v1002, %v1051
      %v1060 = vadd.f32 %v1003, %v1052
      %v1061 = vadd.f32 %v1004, %v1053
      %v1062 = vadd.f32 %v1005, %v1054
      %v1063 = vadd.f32 %v1006, %v1055
      %v1064 = vadd.f32 %v1007, %v1056
      %v1065 = vadd.f32 %v1008, %v1057
      %vm1066 = vcmp.eq.s32.totalorder %v989, 15
      %vm1067 = vcmp.eq.s32.totalorder %v990, 15
      %vm1068 = vcmp.eq.s32.totalorder %v991, 15
      %vm1069 = vcmp.eq.s32.totalorder %v992, 15
      %vm1070 = vcmp.eq.s32.totalorder %v993, 15
      %vm1071 = vcmp.eq.s32.totalorder %v994, 15
      %vm1072 = vcmp.eq.s32.totalorder %v995, 15
      %vm1073 = vcmp.eq.s32.totalorder %v996, 15
      %v1074 = vrot.slane %v884, 1
      %v1075 = vrot.slane %v885, 1
      %v1076 = vrot.slane %v886, 1
      %v1077 = vrot.slane %v887, 1
      %v1078 = vrot.slane %v888, 1
      %v1079 = vrot.slane %v889, 1
      %v1080 = vrot.slane %v890, 1
      %v1081 = vrot.slane %v891, 1
      %vm1082 = vcmp.lt.s32.totalorder %v893, 7
      %v1083 = vsel %vm1082, %v1080, %v1081
      %v1084 = vsel %vm1082, %v1079, %v1080
      %v1085 = vsel %vm1082, %v1078, %v1079
      %v1086 = vsel %vm1082, %v1077, %v1078
      %v1087 = vsel %vm1082, %v1076, %v1077
      %v1088 = vsel %vm1082, %v1075, %v1076
      %v1089 = vsel %vm1082, %v1074, %v1075
      %v1090 = vsel %vm1082, %v1081, %v1074
      %v1091 = vsel %vm1066, 1, 0
      %v1092 = vsel %vm1067, 1, 0
      %v1093 = vsel %vm1068, 1, 0
      %v1094 = vsel %vm1069, 1, 0
      %v1095 = vsel %vm1070, 1, 0
      %v1096 = vsel %vm1071, 1, 0
      %v1097 = vsel %vm1072, 1, 0
      %v1098 = vsel %vm1073, 1, 0
      %vm1099 = vcmp.eq.s32.totalorder %v1091, 1
      %vm1100 = vcmp.eq.s32.totalorder %v1092, 1
      %vm1101 = vcmp.eq.s32.totalorder %v1093, 1
      %vm1102 = vcmp.eq.s32.totalorder %v1094, 1
      %vm1103 = vcmp.eq.s32.totalorder %v1095, 1
      %vm1104 = vcmp.eq.s32.totalorder %v1096, 1
      %vm1105 = vcmp.eq.s32.totalorder %v1097, 1
      %vm1106 = vcmp.eq.s32.totalorder %v1098, 1
      %v1107 = vsel %vm1099, 0.0, %v1089
      %v1108 = vsel %vm1100, 0.0, %v1088
      %v1109 = vsel %vm1101, 0.0, %v1087
      %v1110 = vsel %vm1102, 0.0, %v1086
      %v1111 = vsel %vm1103, 0.0, %v1085
      %v1112 = vsel %vm1104, 0.0, %v1084
      %v1113 = vsel %vm1105, 0.0, %v1083
      %v1114 = vsel %vm1106, 0.0, %v1090
      %v1115 = vadd.f32 %v1058, %v1107
      %v1116 = vadd.f32 %v1059, %v1108
      %v1117 = vadd.f32 %v1060, %v1109
      %v1118 = vadd.f32 %v1061, %v1110
      %v1119 = vadd.f32 %v1062, %v1111
      %v1120 = vadd.f32 %v1063, %v1112
      %v1121 = vadd.f32 %v1064, %v1113
      %v1122 = vadd.f32 %v1065, %v1114
      %v1123 = vxor.u32 %v1115, 2147483648
      %v1124 = vxor.u32 %v1116, 2147483648
      %v1125 = vxor.u32 %v1117, 2147483648
      %v1126 = vxor.u32 %v1118, 2147483648
      %v1127 = vxor.u32 %v1119, 2147483648
      %v1128 = vxor.u32 %v1120, 2147483648
      %v1129 = vxor.u32 %v1121, 2147483648
      %v1130 = vxor.u32 %v1122, 2147483648
      %v1131 = vmul.f32 %v1123, 1.442695
      %v1132 = vpow.pop %v1131
      %v1133 = vmul.f32 %v1124, 1.442695
      %v1134 = vpow.pop %v1133
      %v1135 = vmul.f32 %v1125, 1.442695
      %v1136 = vpow.pop %v1135
      %v1137 = vmul.f32 %v1126, 1.442695
      %v1138 = vpow.pop %v1137
      %v1139 = vmul.f32 %v1127, 1.442695
      %v1140 = vpow.pop %v1139
      %v1141 = vmul.f32 %v1128, 1.442695
      %v1142 = vpow.pop %v1141
      %v1143 = vmul.f32 %v1129, 1.442695
      %v1144 = vpow.pop %v1143
      %v1145 = vmul.f32 %v1130, 1.442695
      %v1146 = vpow.pop %v1145
      %v1147 = vadd.f32 %v1132, 1.0
      %v1148 = vadd.f32 %v1134, 1.0
      %v1149 = vadd.f32 %v1136, 1.0
      %v1150 = vadd.f32 %v1138, 1.0
      %v1151 = vadd.f32 %v1140, 1.0
      %v1152 = vadd.f32 %v1142, 1.0
      %v1153 = vadd.f32 %v1144, 1.0
      %v1154 = vadd.f32 %v1146, 1.0
      %v1155 = vrcp.pop %v1147
      %v1156 = vmul.f32 %v1147, %v1155
      %v1157 = vsub.f32 1.0, %v1156
      %v1158 = vmul.f32 %v1155, %v1157
      %v1159 = vadd.f32 %v1155, %v1158
      %vm1160 = vweird.f32 %v1147
      %vm1161 = vweird.f32 %v1155
      %vm1162 = vmor %vm1160, %vm1161
      %v1163 = vsel %vm1162, %v1155, %v1159
      %v1164 = vand.u32 2147483647, %v1147
      %vm1165 = vcmp.eq.f32.partialorder %v1164, 8.507059e+37
      %v1166 = vand.u32 %v1147, 2147483648
      %v1167 = vor.u32 1.1754944e-38, %v1166
      %v1168 = vsel %vm1165, %v1167, %v1163
      %v1169 = vmul.f32 1.0, %v1168
      %v1170 = vrcp.pop %v1148
      %v1171 = vmul.f32 %v1148, %v1170
      %v1172 = vsub.f32 1.0, %v1171
      %v1173 = vmul.f32 %v1170, %v1172
      %v1174 = vadd.f32 %v1170, %v1173
      %vm1175 = vweird.f32 %v1148
      %vm1176 = vweird.f32 %v1170
      %vm1177 = vmor %vm1175, %vm1176
      %v1178 = vsel %vm1177, %v1170, %v1174
      %v1179 = vand.u32 2147483647, %v1148
      %vm1180 = vcmp.eq.f32.partialorder %v1179, 8.507059e+37
      %v1181 = vand.u32 %v1148, 2147483648
      %v1182 = vor.u32 1.1754944e-38, %v1181
      %v1183 = vsel %vm1180, %v1182, %v1178
      %v1184 = vmul.f32 1.0, %v1183
      %v1185 = vrcp.pop %v1149
      %v1186 = vmul.f32 %v1149, %v1185
      %v1187 = vsub.f32 1.0, %v1186
      %v1188 = vmul.f32 %v1185, %v1187
      %v1189 = vadd.f32 %v1185, %v1188
      %vm1190 = vweird.f32 %v1149
      %vm1191 = vweird.f32 %v1185
      %vm1192 = vmor %vm1190, %vm1191
      %v1193 = vsel %vm1192, %v1185, %v1189
      %v1194 = vand.u32 2147483647, %v1149
      %vm1195 = vcmp.eq.f32.partialorder %v1194, 8.507059e+37
      %v1196 = vand.u32 %v1149, 2147483648
      %v1197 = vor.u32 1.1754944e-38, %v1196
      %v1198 = vsel %vm1195, %v1197, %v1193
      %v1199 = vmul.f32 1.0, %v1198
      %v1200 = vrcp.pop %v1150
      %v1201 = vmul.f32 %v1150, %v1200
      %v1202 = vsub.f32 1.0, %v1201
      %v1203 = vmul.f32 %v1200, %v1202
      %v1204 = vadd.f32 %v1200, %v1203
      %vm1205 = vweird.f32 %v1150
      %vm1206 = vweird.f32 %v1200
      %vm1207 = vmor %vm1205, %vm1206
      %v1208 = vsel %vm1207, %v1200, %v1204
      %v1209 = vand.u32 2147483647, %v1150
      %vm1210 = vcmp.eq.f32.partialorder %v1209, 8.507059e+37
      %v1211 = vand.u32 %v1150, 2147483648
      %v1212 = vor.u32 1.1754944e-38, %v1211
      %v1213 = vsel %vm1210, %v1212, %v1208
      %v1214 = vmul.f32 1.0, %v1213
      %v1215 = vrcp.pop %v1151
      %v1216 = vmul.f32 %v1151, %v1215
      %v1217 = vsub.f32 1.0, %v1216
      %v1218 = vmul.f32 %v1215, %v1217
      %v1219 = vadd.f32 %v1215, %v1218
      %vm1220 = vweird.f32 %v1151
      %vm1221 = vweird.f32 %v1215
      %vm1222 = vmor %vm1220, %vm1221
      %v1223 = vsel %vm1222, %v1215, %v1219
      %v1224 = vand.u32 2147483647, %v1151
      %vm1225 = vcmp.eq.f32.partialorder %v1224, 8.507059e+37
      %v1226 = vand.u32 %v1151, 2147483648
      %v1227 = vor.u32 1.1754944e-38, %v1226
      %v1228 = vsel %vm1225, %v1227, %v1223
      %v1229 = vmul.f32 1.0, %v1228
      %v1230 = vrcp.pop %v1152
      %v1231 = vmul.f32 %v1152, %v1230
      %v1232 = vsub.f32 1.0, %v1231
      %v1233 = vmul.f32 %v1230, %v1232
      %v1234 = vadd.f32 %v1230, %v1233
      %vm1235 = vweird.f32 %v1152
      %vm1236 = vweird.f32 %v1230
      %vm1237 = vmor %vm1235, %vm1236
      %v1238 = vsel %vm1237, %v1230, %v1234
      %v1239 = vand.u32 2147483647, %v1152
      %vm1240 = vcmp.eq.f32.partialorder %v1239, 8.507059e+37
      %v1241 = vand.u32 %v1152, 2147483648
      %v1242 = vor.u32 1.1754944e-38, %v1241
      %v1243 = vsel %vm1240, %v1242, %v1238
      %v1244 = vmul.f32 1.0, %v1243
      %v1245 = vrcp.pop %v1153
      %v1246 = vmul.f32 %v1153, %v1245
      %v1247 = vsub.f32 1.0, %v1246
      %v1248 = vmul.f32 %v1245, %v1247
      %v1249 = vadd.f32 %v1245, %v1248
      %vm1250 = vweird.f32 %v1153
      %vm1251 = vweird.f32 %v1245
      %vm1252 = vmor %vm1250, %vm1251
      %v1253 = vsel %vm1252, %v1245, %v1249
      %v1254 = vand.u32 2147483647, %v1153
      %vm1255 = vcmp.eq.f32.partialorder %v1254, 8.507059e+37
      %v1256 = vand.u32 %v1153, 2147483648
      %v1257 = vor.u32 1.1754944e-38, %v1256
      %v1258 = vsel %vm1255, %v1257, %v1253
      %v1259 = vmul.f32 1.0, %v1258
      %v1260 = vrcp.pop %v1154
      %v1261 = vmul.f32 %v1154, %v1260
      %v1262 = vsub.f32 1.0, %v1261
      %v1263 = vmul.f32 %v1260, %v1262
      %v1264 = vadd.f32 %v1260, %v1263
      %vm1265 = vweird.f32 %v1154
      %vm1266 = vweird.f32 %v1260
      %vm1267 = vmor %vm1265, %vm1266
      %v1268 = vsel %vm1267, %v1260, %v1264
      %v1269 = vand.u32 2147483647, %v1154
      %vm1270 = vcmp.eq.f32.partialorder %v1269, 8.507059e+37
      %v1271 = vand.u32 %v1154, 2147483648
      %v1272 = vor.u32 1.1754944e-38, %v1271
      %v1273 = vsel %vm1270, %v1272, %v1268
      %v1274 = vmul.f32 1.0, %v1273
      %v1275 = vmul.f32 %v393, %v1169
      %v1276 = vmul.f32 %v394, %v1184
      %v1277 = vmul.f32 %v395, %v1199
      %v1278 = vmul.f32 %v396, %v1214
      %v1279 = vmul.f32 %v397, %v1229
      %v1280 = vmul.f32 %v398, %v1244
      %v1281 = vmul.f32 %v399, %v1259
      %v1282 = vmul.f32 %v400, %v1274
      %1283 = vst.msk [vmem:[%s391] sm:$0xff] %vm424, %v1275
      %1284 = vst.msk [vmem:[%s391 + $0x8] sm:$0xff] %vm424, %v1276
      %1285 = vst.msk [vmem:[%s391 + $0x10] sm:$0xff] %vm424, %v1277
      %1286 = vst.msk [vmem:[%s391 + $0x18] sm:$0xff] %vm424, %v1278
      %1287 = vst.msk [vmem:[%s391 + $0x20] sm:$0xff] %vm424, %v1279
      %1288 = vst.msk [vmem:[%s391 + $0x28] sm:$0xff] %vm424, %v1280
      %1289 = vst.msk [vmem:[%s391 + $0x30] sm:$0xff] %vm424, %v1281
      %1290 = vst.msk [vmem:[%s391 + $0x38] sm:$0xff] %vm424, %v1282
      %s1291 = smul.u32 4, %s21
      %p1292 = scmp.lt.s32.totalorder %s20, 1
      %s1293 = scalar_select %p1292, %s20, 1
      %p1294 = scmp.lt.s32.totalorder %s1291, 15
      %s1295 = scalar_select %p1294, %s1291, 15
      %s1296 = smul.addr %s1295, 2
      %s1297 = smul.addr %s1293, 32
      %s1298 = sadd.s32 %s1296, %s1297
      %s1299 = smul.addr %s1298, 8
      %s1300 = scalar_lea.vmem %s5, %s1299
      // Predicated region
      $region41: #{tpu_custom_call.1} parent=39 // pred_check
        %p1301 = pneg %p190
      $region42: #{tpu_custom_call.1} parent=39 // pred_check_branch
        %1303 = sbr.rel (%p1301) target = $region44
      $region43: #{tpu_custom_call.1} parent=39 // pred_region
        %s1304 = smul.u32 4, %s21
      $region44: #{tpu_custom_call.1} parent=39 // pred_fallthru
        _
    $region40: #{tpu_custom_call.1} parent=5 // pred_fallthru
      _
    %p1305 = scmp.le.s32.totalorder 2, %s11
    // Predicated region
    $region45: #{tpu_custom_call.1} parent=5 // pred_check
      %p1306 = pneg %p1305
    $region46: #{tpu_custom_call.1} parent=5 // pred_check_branch
      %1308 = sbr.rel (%p1306) target = $region48
    $region47: #{tpu_custom_call.1} parent=5 // pred_region
      %s1309 = ssub.s32 %s11, 2
      // Predicated region
      $region49: #{tpu_custom_call.1} parent=47 // pred_check
        %p1310 = pneg %p196
      $region50: #{tpu_custom_call.1} parent=47 // pred_check_branch
        %1312 = sbr.rel (%p1310) target = $region52
      $region51: #{tpu_custom_call.1} parent=47 // pred_region
        %s1313 = smul.u32 4, %s23
        %p1314 = scmp.lt.s32.totalorder %s22, 1
        %s1315 = scalar_select %p1314, %s22, 1
        %p1316 = scmp.lt.s32.totalorder %s1313, 15
        %s1317 = scalar_select %p1316, %s1313, 15
        %s1318 = smul.addr %s1317, 2
        %s1319 = smul.addr %s1315, 32
        %s1320 = sadd.s32 %s1318, %s1319
        %s1321 = smul.addr %s1320, 8
        %s1322 = scalar_lea.vmem %s5, %s1321
      $region52: #{tpu_custom_call.1} parent=47 // pred_fallthru
        _
    $region48: #{tpu_custom_call.1} parent=5 // pred_fallthru
      _
  $region6: #{tpu_custom_call.1} parent=0 // loop_footer
    %s15 = sadd.s32 1, %s11
  $region7: #{tpu_custom_call.1} parent=0 // loop_footer_branch
    %10 = sbr.rel target = $region3
  $region8: #{tpu_custom_call.1} parent=0 // loop_exit
    _

</llo_original>
